<compile_context>
chip_gen: v7x
topology: tpu7x:2x2x1
jax: 0.10.0
libtpu: 0.0.40
codegen_flags: <defaults>
</compile_context>

<pallas_src>
import functools

import jax
import jax.numpy as jnp
from jax.experimental import pallas as pl
from jax.experimental.pallas import tpu as pltpu


def _ru(x, m):
    return (x + m - 1) // m * m


_VMEM_BUDGET = 24 * 1024 * 1024   # tile-sizing budget (fits v7x's 64 MiB VMEM)
_VMEM_LIMIT = 48 * 1024 * 1024    # scoped-VMEM limit (v5e default is only 16 MiB)


def _pick_tm(kp, np_, tm_max=512):
    """Pick an M-tile so 2x(A+O) tiles + resident W fit the VMEM budget."""
    per_row = 2 * (kp * 2 + np_ * 4)          # double-buffered bf16 A + (<=f32) O
    fixed = kp * np_ * 2 + np_ * 4            # resident bf16 W + f32 bias
    avail = _VMEM_BUDGET - fixed
    tm = avail // per_row if avail > 0 else 16
    return max(16, min(tm_max, int(tm) // 16 * 16))


# ----------------------------------------------------------------------------
# Pallas kernels
# ----------------------------------------------------------------------------
def _gemm_bias_act_kernel(a_ref, w_ref, b_ref, o_ref, *, act):
    acc = jnp.dot(a_ref[...], w_ref[...], preferred_element_type=jnp.float32)
    acc = acc + b_ref[...]                       # (tm, N) + (1, N) broadcast, f32
    if act == "relu":
        acc = jnp.maximum(acc, 0.0)
    elif act == "sigmoid":
        acc = jax.nn.sigmoid(acc)
    o_ref[...] = acc.astype(o_ref.dtype)


def gemm_bias_act(a, w_p, b_p, act="none", out_dtype=jnp.bfloat16):
    """act(a @ w + b). w_p: (Kp, Np) bf16 pre-padded; b_p: (1, Np) f32."""
    M, K = a.shape
    Kp, Np = w_p.shape
    tm = min(_pick_tm(Kp, Np), _ru(M, 16))
    Mp = _ru(M, tm)
    a = jnp.pad(a.astype(jnp.bfloat16), ((0, Mp - M), (0, Kp - K)))
    out = pl.pallas_call(
        functools.partial(_gemm_bias_act_kernel, act=act),
        out_shape=jax.ShapeDtypeStruct((Mp, Np), out_dtype),
        grid=(Mp // tm,),
        in_specs=[
            pl.BlockSpec((tm, Kp), lambda i: (i, 0)),
            pl.BlockSpec((Kp, Np), lambda i: (0, 0)),   # resident across grid
            pl.BlockSpec((1, Np), lambda i: (0, 0)),
        ],
        out_specs=pl.BlockSpec((tm, Np), lambda i: (i, 0)),
        compiler_params=pltpu.CompilerParams(
            dimension_semantics=("parallel",),
            vmem_limit_bytes=_VMEM_LIMIT,
        ),
    )(a, w_p, b_p)
    return out[:M] if Mp != M else out


def _encode_head_kernel(a_ref, w_ref, b_ref, eps_ref, z_ref, *, lp):
    acc = jnp.dot(a_ref[...], w_ref[...], preferred_element_type=jnp.float32)
    acc = acc + b_ref[...]
    mu = acc[:, :lp]
    logvar = acc[:, lp:]
    z = mu + jnp.exp(0.5 * logvar) * eps_ref[...]
    z_ref[...] = z.astype(z_ref.dtype)


def encode_head(h_flat, w_cat, b_cat, eps, latent_dims):
    """Fused fc_mu + fc_logvar + reparameterization. Returns lane-dense z."""
    M, K = h_flat.shape
    Kp, N2 = w_cat.shape
    Lp = N2 // 2
    tm = min(_pick_tm(Kp, N2), _ru(M, 16))
    Mp = _ru(M, tm)
    a = jnp.pad(h_flat.astype(jnp.bfloat16), ((0, Mp - M), (0, Kp - K)))
    eps_p = jnp.zeros((Mp, Lp), jnp.float32).at[:M, :latent_dims].set(eps)
    z = pl.pallas_call(
        functools.partial(_encode_head_kernel, lp=Lp),
        out_shape=jax.ShapeDtypeStruct((Mp, Lp), jnp.bfloat16),
        grid=(Mp // tm,),
        in_specs=[
            pl.BlockSpec((tm, Kp), lambda i: (i, 0)),
            pl.BlockSpec((Kp, N2), lambda i: (0, 0)),
            pl.BlockSpec((1, N2), lambda i: (0, 0)),
            pl.BlockSpec((tm, Lp), lambda i: (i, 0)),
        ],
        out_specs=pl.BlockSpec((tm, Lp), lambda i: (i, 0)),
        compiler_params=pltpu.CompilerParams(
            dimension_semantics=("parallel",),
            vmem_limit_bytes=_VMEM_LIMIT,
        ),
    )(a, w_cat, b_cat, eps_p)
    return z[:M]


# ----------------------------------------------------------------------------
# Conv glue: im2col (XLA) feeding the Pallas GEMM kernel
# ----------------------------------------------------------------------------
def _im2col(x_nhwc, kh, kw, stride, pad):
    if pad:
        x_nhwc = jnp.pad(x_nhwc, ((0, 0), (pad, pad), (pad, pad), (0, 0)))
    N, H, W, C = x_nhwc.shape
    Ho = (H - kh) // stride + 1
    Wo = (W - kw) // stride + 1
    patches = []
    for i in range(kh):
        for j in range(kw):
            patches.append(
                x_nhwc[:, i:i + Ho * stride:stride, j:j + Wo * stride:stride, :])
    cols = jnp.stack(patches, axis=3)            # (N, Ho, Wo, kh*kw, C)
    return cols.reshape(N * Ho * Wo, kh * kw * C), Ho, Wo


def conv2d(x_nhwc, w_mat, b_p, cout, k, stride, pad, act,
           out_dtype=jnp.bfloat16):
    cols, ho, wo = _im2col(x_nhwc, k, k, stride, pad)
    out = gemm_bias_act(cols, w_mat, b_p, act, out_dtype)
    return out.reshape(x_nhwc.shape[0], ho, wo, -1)[..., :cout]


def conv_transpose2d_s2(x_nhwc, w_phases, b_p, cout, act,
                        out_dtype=jnp.bfloat16):
    """ConvTranspose2d(k=4, stride=2, pad=1) via sub-pixel phase decomposition.

    Each output phase (oy%2, ox%2) is an ordinary 2x2 / stride-1 conv over the
    un-dilated input -> 4x fewer MXU flops and DMA bytes than the
    zero-dilated dense-conv equivalent.
    """
    N, H, W, _ = x_nhwc.shape
    xs = jnp.pad(x_nhwc, ((0, 0), (1, 1), (1, 1), (0, 0)))
    phases = []
    for idx, (py, px) in enumerate(((0, 0), (0, 1), (1, 0), (1, 1))):
        xp = xs[:, py:py + H + 1, px:px + W + 1, :]
        cols, _, _ = _im2col(xp, 2, 2, 1, 0)                 # (N*H*W, 4*Cin)
        o = gemm_bias_act(cols, w_phases[idx], b_p, act, out_dtype)
        phases.append(o.reshape(N, H, W, -1)[..., :cout])
    ph = jnp.stack(phases, axis=0).reshape(2, 2, N, H, W, cout)
    # ph[py, px, n, qy, qx, c] -> out[n, 2qy+py, 2qx+px, c]
    return jnp.transpose(ph, (2, 3, 0, 4, 1, 5)).reshape(N, 2 * H, 2 * W, cout)


# ----------------------------------------------------------------------------
# Parameters: raw (PyTorch layout) + one-time GEMM-ready preparation
# ----------------------------------------------------------------------------
def init_params(key, latent_dims, img_size, in_ch=3, c1=16, c2=32):
    flat = c2 * (img_size // 4) ** 2
    ks = jax.random.split(key, 14)
    nrm = lambda k, s: 0.05 * jax.random.normal(k, s, jnp.float32)
    return {
        "ec1_w": nrm(ks[0], (c1, in_ch, 4, 4)), "ec1_b": nrm(ks[1], (c1,)),
        "ec2_w": nrm(ks[2], (c2, c1, 4, 4)),    "ec2_b": nrm(ks[3], (c2,)),
        "fc_mu_w": nrm(ks[4], (latent_dims, flat)), "fc_mu_b": nrm(ks[5], (latent_dims,)),
        "fc_lv_w": nrm(ks[6], (latent_dims, flat)), "fc_lv_b": nrm(ks[7], (latent_dims,)),
        "dfc_w": nrm(ks[8], (flat, latent_dims)), "dfc_b": nrm(ks[9], (flat,)),
        "dc1_w": nrm(ks[10], (c2, c1, 4, 4)),   "dc1_b": nrm(ks[11], (c1,)),
        "dc2_w": nrm(ks[12], (c1, in_ch, 4, 4)), "dc2_b": nrm(ks[13], (in_ch,)),
    }


def _pad2(m, rows, cols):
    out = jnp.zeros((rows, cols), jnp.bfloat16)
    return out.at[:m.shape[0], :m.shape[1]].set(m.astype(jnp.bfloat16))


def _bias_row(b, npad):
    return jnp.zeros((1, npad), jnp.float32).at[0, :b.shape[0]].set(b)


def prepare_params(raw, latent_dims, img_size, in_ch=3, c1=16, c2=32):
    """One-time weight prep: transpose / flip / im2col layout / pad / bf16."""
    flat = c2 * (img_size // 4) ** 2
    Lp = _ru(latent_dims, 128)
    Kf = _ru(flat, 128)

    def conv_w(w_pt):                      # (Cout, Cin, kh, kw) -> (kh*kw*Cin, Cout)
        co, ci, kh, kw = w_pt.shape
        m = jnp.transpose(w_pt, (2, 3, 1, 0)).reshape(kh * kw * ci, co)
        return _pad2(m, _ru(kh * kw * ci, 128), _ru(co, 128))

    def deconv_phase_ws(w_pt):             # (Cin, Cout, 4, 4), stride 2, pad 1
        ci, co, _, _ = w_pt.shape
        mats = []
        for py in (0, 1):
            ky = jnp.array((3, 1) if py == 0 else (2, 0))
            for px in (0, 1):
                kx = jnp.array((3, 1) if px == 0 else (2, 0))
                sub = w_pt[:, :, ky, :][:, :, :, kx]          # (Cin, Cout, 2, 2)
                m = jnp.transpose(sub, (2, 3, 0, 1)).reshape(4 * ci, co)
                mats.append(_pad2(m, _ru(4 * ci, 128), _ru(co, 128)))
        return jnp.stack(mats)                                 # (4, Kp, Np)

    head_w = jnp.concatenate(
        [_pad2(raw["fc_mu_w"].T, Kf, Lp), _pad2(raw["fc_lv_w"].T, Kf, Lp)], axis=1)
    head_b = jnp.concatenate(
        [_bias_row(raw["fc_mu_b"], Lp), _bias_row(raw["fc_lv_b"], Lp)], axis=1)

    return {
        "ec1_w": conv_w(raw["ec1_w"]), "ec1_b": _bias_row(raw["ec1_b"], _ru(c1, 128)),
        "ec2_w": conv_w(raw["ec2_w"]), "ec2_b": _bias_row(raw["ec2_b"], _ru(c2, 128)),
        "head_w": head_w, "head_b": head_b,
        "dfc_w": _pad2(raw["dfc_w"].T, Lp, Kf), "dfc_b": _bias_row(raw["dfc_b"], Kf),
        "dc1_w": deconv_phase_ws(raw["dc1_w"]), "dc1_b": _bias_row(raw["dc1_b"], _ru(c1, 128)),
        "dc2_w": deconv_phase_ws(raw["dc2_w"]), "dc2_b": _bias_row(raw["dc2_b"], _ru(in_ch, 128)),
    }


# ----------------------------------------------------------------------------
# VAE forward (Pallas) and pure-JAX reference
# ----------------------------------------------------------------------------
def vae_forward(prep, x_nchw, eps, *, latent_dims, img_size,
                in_ch=3, c1=16, c2=32):
    N = x_nchw.shape[0]
    flat = c2 * (img_size // 4) ** 2
    x = jnp.transpose(x_nchw, (0, 2, 3, 1)).astype(jnp.bfloat16)   # NCHW -> NHWC

    # ---- encoder ----
    h = conv2d(x, prep["ec1_w"], prep["ec1_b"], c1, 4, 2, 1, "relu")   # H/2
    h = conv2d(h, prep["ec2_w"], prep["ec2_b"], c2, 4, 2, 1, "relu")   # H/4
    h_flat = jnp.transpose(h, (0, 3, 1, 2)).reshape(N, -1)             # (C,H,W) order
    z = encode_head(h_flat, prep["head_w"], prep["head_b"], eps, latent_dims)

    # ---- decoder ----
    d = gemm_bias_act(z, prep["dfc_w"], prep["dfc_b"], "relu")
    hh = img_size // 4
    d = d[:, :flat].reshape(N, c2, hh, hh)
    d = jnp.transpose(d, (0, 2, 3, 1))                                 # NCHW -> NHWC
    d = conv_transpose2d_s2(d, prep["dc1_w"], prep["dc1_b"], c1, "relu")
    d = conv_transpose2d_s2(d, prep["dc2_w"], prep["dc2_b"], in_ch, "sigmoid",
                            out_dtype=jnp.float32)
    return jnp.transpose(d, (0, 3, 1, 2)).astype(jnp.float32)          # -> NCHW


def vae_reference(params, x_nchw, eps, *, img_size):
    """Pure-JAX (f32) reference forward, for in-script validation."""
    x = jnp.transpose(x_nchw, (0, 2, 3, 1))

    def conv(x, w, b, s, p):
        y = jax.lax.conv_general_dilated(
            x, w, (s, s), [(p, p), (p, p)],
            dimension_numbers=("NHWC", "OIHW", "NHWC"))
        return y + b

    def convT(x, w_pt, b, s, p):
        kh = w_pt.shape[2]
        w_conv = jnp.transpose(jnp.flip(w_pt, (2, 3)), (1, 0, 2, 3))
        y = jax.lax.conv_general_dilated(
            x, w_conv, (1, 1), [(kh - 1 - p, kh - 1 - p)] * 2,
            lhs_dilation=(s, s), dimension_numbers=("NHWC", "OIHW", "NHWC"))
        return y + b

    N = x.shape[0]
    h = jax.nn.relu(conv(x, params["ec1_w"], params["ec1_b"], 2, 1))
    h = jax.nn.relu(conv(h, params["ec2_w"], params["ec2_b"], 2, 1))
    hf = jnp.transpose(h, (0, 3, 1, 2)).reshape(N, -1)
    mu = hf @ params["fc_mu_w"].T + params["fc_mu_b"]
    lv = hf @ params["fc_lv_w"].T + params["fc_lv_b"]
    z = mu + jnp.exp(0.5 * lv) * eps
    d = jax.nn.relu(z @ params["dfc_w"].T + params["dfc_b"])
    c2 = params["dc1_w"].shape[0]
    hh = img_size // 4
    d = jnp.transpose(d.reshape(N, c2, hh, hh), (0, 2, 3, 1))
    d = jax.nn.relu(convT(d, params["dc1_w"], params["dc1_b"], 2, 1))
    d = jax.nn.sigmoid(convT(d, params["dc2_w"], params["dc2_b"], 2, 1))
    return jnp.transpose(d, (0, 3, 1, 2))


# ----------------------------------------------------------------------------
if __name__ == "__main__":
    key = jax.random.PRNGKey(0)
    latent_dims, img_size, batch, in_ch = 8, 16, 2, 3
    kp, kx, ke = jax.random.split(key, 3)

    raw = init_params(kp, latent_dims, img_size, in_ch)
    prep = prepare_params(raw, latent_dims, img_size, in_ch)

    x = jax.random.normal(kx, (batch, in_ch, img_size, img_size), jnp.float32)
    eps = jax.random.normal(ke, (batch, latent_dims), jnp.float32)

    fwd = jax.jit(functools.partial(vae_forward, latent_dims=latent_dims,
                                    img_size=img_size, in_ch=in_ch))
    out = jax.block_until_ready(fwd(prep, x, eps))

    ref = vae_reference(raw, x, eps, img_size=img_size)

    assert out.shape == (batch, in_ch, img_size, img_size), out.shape
    assert bool(jnp.all(jnp.isfinite(out)))
    assert bool(jnp.all((out >= 0.0) & (out <= 1.0)))     # sigmoid output
    err = float(jnp.max(jnp.abs(out - ref)))
    assert err < 5e-2, f"max abs err vs reference: {err}"
    print("KERNEL_OK")
</pallas_src>

<mosaic_0001>
module attributes {stable_mosaic.version = 11 : i64} {
  func.func @_gemm_bias_act_kernel(%arg0: i32, %arg1: memref<128x128xbf16, #tpu.memory_space<vmem>>, %arg2: memref<128x128xbf16, #tpu.memory_space<vmem>>, %arg3: memref<1x128xf32, #tpu.memory_space<vmem>>, %arg4: memref<128x128xbf16, #tpu.memory_space<vmem>>) attributes {dimension_semantics = [#tpu.dimension_semantics<parallel>], iteration_bounds = array<i64: 1>, scalar_prefetch = 0 : i64, scratch_operands = 0 : i64, tpu.core_type = #tpu.core_type<tc>, window_params = [{transform_indices = @transform_0, window_bounds = array<i64: 128, 128>}, {pipeline_mode = #tpu.pipeline_mode<synchronous>, transform_indices = @transform_1, window_bounds = array<i64: 128, 128>}, {pipeline_mode = #tpu.pipeline_mode<synchronous>, transform_indices = @transform_2, window_bounds = array<i64: 1, 128>}, {transform_indices = @transform_3, window_bounds = array<i64: 128, 128>}]} {
    %c0 = arith.constant 0 : index
    %c0_0 = arith.constant 0 : index
    %0 = vector.load %arg1[%c0, %c0_0] : memref<128x128xbf16, #tpu.memory_space<vmem>>, vector<128x128xbf16>
    %c0_1 = arith.constant 0 : index
    %c0_2 = arith.constant 0 : index
    %1 = vector.load %arg2[%c0_1, %c0_2] : memref<128x128xbf16, #tpu.memory_space<vmem>>, vector<128x128xbf16>
    %cst = arith.constant dense<0.000000e+00> : vector<128x128xf32>
    %2 = tpu.matmul %0, %1, %cst {dimension_numbers = #tpu.dot_dimension_numbers<[1], [0], [0], [1], [0, 0, 1, 1], [], []>} : vector<128x128xbf16>, vector<128x128xbf16>, vector<128x128xf32> -> vector<128x128xf32>
    %c0_3 = arith.constant 0 : index
    %c0_4 = arith.constant 0 : index
    %3 = vector.load %arg3[%c0_3, %c0_4] : memref<1x128xf32, #tpu.memory_space<vmem>>, vector<1x128xf32>
    %4 = vector.broadcast %3 : vector<1x128xf32> to vector<128x128xf32>
    %5 = arith.addf %2, %4 : vector<128x128xf32>
    %cst_5 = arith.constant 0.000000e+00 : f32
    %6 = vector.broadcast %cst_5 : f32 to vector<128x128xf32>
    %7 = arith.maximumf %5, %6 : vector<128x128xf32>
    %8 = arith.truncf %7 : vector<128x128xf32> to vector<128x128xbf16>
    %c0_6 = arith.constant 0 : index
    %c0_7 = arith.constant 0 : index
    %9 = vector.load %arg4[%c0_6, %c0_7] : memref<128x128xbf16, #tpu.memory_space<vmem>>, vector<128x128xbf16>
    tpu.vector_store %arg4[%c0_6, %c0_7], %8 {strides = array<i32>} : memref<128x128xbf16, #tpu.memory_space<vmem>>, vector<128x128xbf16>,
    return
  }
  func.func @transform_0(%arg0: i32) -> (i32, i32) {
    %c0_i32 = arith.constant 0 : i32
    %c0_i32_0 = arith.constant 0 : i32
    return %arg0, %c0_i32 : i32, i32
  }
  func.func @transform_1(%arg0: i32) -> (i32, i32) {
    %c0_i32 = arith.constant 0 : i32
    %c0_i32_0 = arith.constant 0 : i32
    %c0_i32_1 = arith.constant 0 : i32
    return %c0_i32, %c0_i32_0 : i32, i32
  }
  func.func @transform_2(%arg0: i32) -> (i32, i32) {
    %c0_i32 = arith.constant 0 : i32
    %c0_i32_0 = arith.constant 0 : i32
    %c0_i32_1 = arith.constant 0 : i32
    return %c0_i32, %c0_i32_0 : i32, i32
  }
  func.func @transform_3(%arg0: i32) -> (i32, i32) {
    %c0_i32 = arith.constant 0 : i32
    %c0_i32_0 = arith.constant 0 : i32
    return %arg0, %c0_i32 : i32, i32
  }
}

module attributes {stable_mosaic.version = 11 : i64} {
  func.func @_gemm_bias_act_kernel(%arg0: i32, %arg1: memref<32x256xbf16, #tpu.memory_space<vmem>>, %arg2: memref<256x128xbf16, #tpu.memory_space<vmem>>, %arg3: memref<1x128xf32, #tpu.memory_space<vmem>>, %arg4: memref<32x128xbf16, #tpu.memory_space<vmem>>) attributes {dimension_semantics = [#tpu.dimension_semantics<parallel>], iteration_bounds = array<i64: 1>, scalar_prefetch = 0 : i64, scratch_operands = 0 : i64, tpu.core_type = #tpu.core_type<tc>, window_params = [{transform_indices = @transform_0, window_bounds = array<i64: 32, 256>}, {pipeline_mode = #tpu.pipeline_mode<synchronous>, transform_indices = @transform_1, window_bounds = array<i64: 256, 128>}, {pipeline_mode = #tpu.pipeline_mode<synchronous>, transform_indices = @transform_2, window_bounds = array<i64: 1, 128>}, {transform_indices = @transform_3, window_bounds = array<i64: 32, 128>}]} {
    %c0 = arith.constant 0 : index
    %c0_0 = arith.constant 0 : index
    %0 = vector.load %arg1[%c0, %c0_0] : memref<32x256xbf16, #tpu.memory_space<vmem>>, vector<32x256xbf16>
    %c0_1 = arith.constant 0 : index
    %c0_2 = arith.constant 0 : index
    %1 = vector.load %arg2[%c0_1, %c0_2] : memref<256x128xbf16, #tpu.memory_space<vmem>>, vector<256x128xbf16>
    %cst = arith.constant dense<0.000000e+00> : vector<32x128xf32>
    %2 = tpu.matmul %0, %1, %cst {dimension_numbers = #tpu.dot_dimension_numbers<[1], [0], [0], [1], [0, 0, 1, 1], [], []>} : vector<32x256xbf16>, vector<256x128xbf16>, vector<32x128xf32> -> vector<32x128xf32>
    %c0_3 = arith.constant 0 : index
    %c0_4 = arith.constant 0 : index
    %3 = vector.load %arg3[%c0_3, %c0_4] : memref<1x128xf32, #tpu.memory_space<vmem>>, vector<1x128xf32>
    %4 = vector.broadcast %3 : vector<1x128xf32> to vector<32x128xf32>
    %5 = arith.addf %2, %4 : vector<32x128xf32>
    %cst_5 = arith.constant 0.000000e+00 : f32
    %6 = vector.broadcast %cst_5 : f32 to vector<32x128xf32>
    %7 = arith.maximumf %5, %6 : vector<32x128xf32>
    %8 = arith.truncf %7 : vector<32x128xf32> to vector<32x128xbf16>
    %c0_6 = arith.constant 0 : index
    %c0_7 = arith.constant 0 : index
    %9 = vector.load %arg4[%c0_6, %c0_7] : memref<32x128xbf16, #tpu.memory_space<vmem>>, vector<32x128xbf16>
    tpu.vector_store %arg4[%c0_6, %c0_7], %8 {strides = array<i32>} : memref<32x128xbf16, #tpu.memory_space<vmem>>, vector<32x128xbf16>,
    return
  }
  func.func @transform_0(%arg0: i32) -> (i32, i32) {
    %c0_i32 = arith.constant 0 : i32
    %c0_i32_0 = arith.constant 0 : i32
    return %arg0, %c0_i32 : i32, i32
  }
  func.func @transform_1(%arg0: i32) -> (i32, i32) {
    %c0_i32 = arith.constant 0 : i32
    %c0_i32_0 = arith.constant 0 : i32
    %c0_i32_1 = arith.constant 0 : i32
    return %c0_i32, %c0_i32_0 : i32, i32
  }
  func.func @transform_2(%arg0: i32) -> (i32, i32) {
    %c0_i32 = arith.constant 0 : i32
    %c0_i32_0 = arith.constant 0 : i32
    %c0_i32_1 = arith.constant 0 : i32
    return %c0_i32, %c0_i32_0 : i32, i32
  }
  func.func @transform_3(%arg0: i32) -> (i32, i32) {
    %c0_i32 = arith.constant 0 : i32
    %c0_i32_0 = arith.constant 0 : i32
    return %arg0, %c0_i32 : i32, i32
  }
}

module attributes {stable_mosaic.version = 11 : i64} {
  func.func @_gemm_bias_act_kernel(%arg0: i32, %arg1: memref<16x128xbf16, #tpu.memory_space<vmem>>, %arg2: memref<128x512xbf16, #tpu.memory_space<vmem>>, %arg3: memref<1x512xf32, #tpu.memory_space<vmem>>, %arg4: memref<16x512xbf16, #tpu.memory_space<vmem>>) attributes {dimension_semantics = [#tpu.dimension_semantics<parallel>], iteration_bounds = array<i64: 1>, scalar_prefetch = 0 : i64, scratch_operands = 0 : i64, tpu.core_type = #tpu.core_type<tc>, window_params = [{transform_indices = @transform_0, window_bounds = array<i64: 16, 128>}, {pipeline_mode = #tpu.pipeline_mode<synchronous>, transform_indices = @transform_1, window_bounds = array<i64: 128, 512>}, {pipeline_mode = #tpu.pipeline_mode<synchronous>, transform_indices = @transform_2, window_bounds = array<i64: 1, 512>}, {transform_indices = @transform_3, window_bounds = array<i64: 16, 512>}]} {
    %c0 = arith.constant 0 : index
    %c0_0 = arith.constant 0 : index
    %0 = vector.load %arg1[%c0, %c0_0] : memref<16x128xbf16, #tpu.memory_space<vmem>>, vector<16x128xbf16>
    %c0_1 = arith.constant 0 : index
    %c0_2 = arith.constant 0 : index
    %1 = vector.load %arg2[%c0_1, %c0_2] : memref<128x512xbf16, #tpu.memory_space<vmem>>, vector<128x512xbf16>
    %cst = arith.constant dense<0.000000e+00> : vector<16x512xf32>
    %2 = tpu.matmul %0, %1, %cst {dimension_numbers = #tpu.dot_dimension_numbers<[1], [0], [0], [1], [0, 0, 1, 1], [], []>} : vector<16x128xbf16>, vector<128x512xbf16>, vector<16x512xf32> -> vector<16x512xf32>
    %c0_3 = arith.constant 0 : index
    %c0_4 = arith.constant 0 : index
    %3 = vector.load %arg3[%c0_3, %c0_4] : memref<1x512xf32, #tpu.memory_space<vmem>>, vector<1x512xf32>
    %4 = vector.broadcast %3 : vector<1x512xf32> to vector<16x512xf32>
    %5 = arith.addf %2, %4 : vector<16x512xf32>
    %cst_5 = arith.constant 0.000000e+00 : f32
    %6 = vector.broadcast %cst_5 : f32 to vector<16x512xf32>
    %7 = arith.maximumf %5, %6 : vector<16x512xf32>
    %8 = arith.truncf %7 : vector<16x512xf32> to vector<16x512xbf16>
    %c0_6 = arith.constant 0 : index
    %c0_7 = arith.constant 0 : index
    %9 = vector.load %arg4[%c0_6, %c0_7] : memref<16x512xbf16, #tpu.memory_space<vmem>>, vector<16x512xbf16>
    tpu.vector_store %arg4[%c0_6, %c0_7], %8 {strides = array<i32>} : memref<16x512xbf16, #tpu.memory_space<vmem>>, vector<16x512xbf16>,
    return
  }
  func.func @transform_0(%arg0: i32) -> (i32, i32) {
    %c0_i32 = arith.constant 0 : i32
    %c0_i32_0 = arith.constant 0 : i32
    return %arg0, %c0_i32 : i32, i32
  }
  func.func @transform_1(%arg0: i32) -> (i32, i32) {
    %c0_i32 = arith.constant 0 : i32
    %c0_i32_0 = arith.constant 0 : i32
    %c0_i32_1 = arith.constant 0 : i32
    return %c0_i32, %c0_i32_0 : i32, i32
  }
  func.func @transform_2(%arg0: i32) -> (i32, i32) {
    %c0_i32 = arith.constant 0 : i32
    %c0_i32_0 = arith.constant 0 : i32
    %c0_i32_1 = arith.constant 0 : i32
    return %c0_i32, %c0_i32_0 : i32, i32
  }
  func.func @transform_3(%arg0: i32) -> (i32, i32) {
    %c0_i32 = arith.constant 0 : i32
    %c0_i32_0 = arith.constant 0 : i32
    return %arg0, %c0_i32 : i32, i32
  }
}

module attributes {stable_mosaic.version = 11 : i64} {
  func.func @_encode_head_kernel(%arg0: i32, %arg1: memref<16x512xbf16, #tpu.memory_space<vmem>>, %arg2: memref<512x256xbf16, #tpu.memory_space<vmem>>, %arg3: memref<1x256xf32, #tpu.memory_space<vmem>>, %arg4: memref<16x128xf32, #tpu.memory_space<vmem>>, %arg5: memref<16x128xbf16, #tpu.memory_space<vmem>>) attributes {dimension_semantics = [#tpu.dimension_semantics<parallel>], iteration_bounds = array<i64: 1>, scalar_prefetch = 0 : i64, scratch_operands = 0 : i64, tpu.core_type = #tpu.core_type<tc>, window_params = [{transform_indices = @transform_0, window_bounds = array<i64: 16, 512>}, {pipeline_mode = #tpu.pipeline_mode<synchronous>, transform_indices = @transform_1, window_bounds = array<i64: 512, 256>}, {pipeline_mode = #tpu.pipeline_mode<synchronous>, transform_indices = @transform_2, window_bounds = array<i64: 1, 256>}, {transform_indices = @transform_3, window_bounds = array<i64: 16, 128>}, {transform_indices = @transform_4, window_bounds = array<i64: 16, 128>}]} {
    %c0 = arith.constant 0 : index
    %c0_0 = arith.constant 0 : index
    %0 = vector.load %arg1[%c0, %c0_0] : memref<16x512xbf16, #tpu.memory_space<vmem>>, vector<16x512xbf16>
    %c0_1 = arith.constant 0 : index
    %c0_2 = arith.constant 0 : index
    %1 = vector.load %arg2[%c0_1, %c0_2] : memref<512x256xbf16, #tpu.memory_space<vmem>>, vector<512x256xbf16>
    %cst = arith.constant dense<0.000000e+00> : vector<16x256xf32>
    %2 = tpu.matmul %0, %1, %cst {dimension_numbers = #tpu.dot_dimension_numbers<[1], [0], [0], [1], [0, 0, 1, 1], [], []>} : vector<16x512xbf16>, vector<512x256xbf16>, vector<16x256xf32> -> vector<16x256xf32>
    %c0_3 = arith.constant 0 : index
    %c0_4 = arith.constant 0 : index
    %3 = vector.load %arg3[%c0_3, %c0_4] : memref<1x256xf32, #tpu.memory_space<vmem>>, vector<1x256xf32>
    %4 = vector.broadcast %3 : vector<1x256xf32> to vector<16x256xf32>
    %5 = arith.addf %2, %4 : vector<16x256xf32>
    %6 = vector.extract_strided_slice %5 {offsets = [0, 0], sizes = [16, 128], strides = [1, 1]} : vector<16x256xf32> to vector<16x128xf32>
    %7 = vector.extract_strided_slice %5 {offsets = [0, 128], sizes = [16, 128], strides = [1, 1]} : vector<16x256xf32> to vector<16x128xf32>
    %cst_5 = arith.constant 5.000000e-01 : f32
    %8 = vector.broadcast %cst_5 : f32 to vector<16x128xf32>
    %9 = arith.mulf %8, %7 : vector<16x128xf32>
    %10 = math.exp %9 : vector<16x128xf32>
    %c0_6 = arith.constant 0 : index
    %c0_7 = arith.constant 0 : index
    %11 = vector.load %arg4[%c0_6, %c0_7] : memref<16x128xf32, #tpu.memory_space<vmem>>, vector<16x128xf32>
    %12 = arith.mulf %10, %11 : vector<16x128xf32>
    %13 = arith.addf %6, %12 : vector<16x128xf32>
    %14 = arith.truncf %13 : vector<16x128xf32> to vector<16x128xbf16>
    %c0_8 = arith.constant 0 : index
    %c0_9 = arith.constant 0 : index
    %15 = vector.load %arg5[%c0_8, %c0_9] : memref<16x128xbf16, #tpu.memory_space<vmem>>, vector<16x128xbf16>
    tpu.vector_store %arg5[%c0_8, %c0_9], %14 {strides = array<i32>} : memref<16x128xbf16, #tpu.memory_space<vmem>>, vector<16x128xbf16>,
    return
  }
  func.func @transform_0(%arg0: i32) -> (i32, i32) {
    %c0_i32 = arith.constant 0 : i32
    %c0_i32_0 = arith.constant 0 : i32
    return %arg0, %c0_i32 : i32, i32
  }
  func.func @transform_1(%arg0: i32) -> (i32, i32) {
    %c0_i32 = arith.constant 0 : i32
    %c0_i32_0 = arith.constant 0 : i32
    %c0_i32_1 = arith.constant 0 : i32
    return %c0_i32, %c0_i32_0 : i32, i32
  }
  func.func @transform_2(%arg0: i32) -> (i32, i32) {
    %c0_i32 = arith.constant 0 : i32
    %c0_i32_0 = arith.constant 0 : i32
    %c0_i32_1 = arith.constant 0 : i32
    return %c0_i32, %c0_i32_0 : i32, i32
  }
  func.func @transform_3(%arg0: i32) -> (i32, i32) {
    %c0_i32 = arith.constant 0 : i32
    %c0_i32_0 = arith.constant 0 : i32
    return %arg0, %c0_i32 : i32, i32
  }
  func.func @transform_4(%arg0: i32) -> (i32, i32) {
    %c0_i32 = arith.constant 0 : i32
    %c0_i32_0 = arith.constant 0 : i32
    return %arg0, %c0_i32 : i32, i32
  }
}

module attributes {stable_mosaic.version = 11 : i64} {
  func.func @_gemm_bias_act_kernel(%arg0: i32, %arg1: memref<32x128xbf16, #tpu.memory_space<vmem>>, %arg2: memref<128x128xbf16, #tpu.memory_space<vmem>>, %arg3: memref<1x128xf32, #tpu.memory_space<vmem>>, %arg4: memref<32x128xbf16, #tpu.memory_space<vmem>>) attributes {dimension_semantics = [#tpu.dimension_semantics<parallel>], iteration_bounds = array<i64: 1>, scalar_prefetch = 0 : i64, scratch_operands = 0 : i64, tpu.core_type = #tpu.core_type<tc>, window_params = [{transform_indices = @transform_0, window_bounds = array<i64: 32, 128>}, {pipeline_mode = #tpu.pipeline_mode<synchronous>, transform_indices = @transform_1, window_bounds = array<i64: 128, 128>}, {pipeline_mode = #tpu.pipeline_mode<synchronous>, transform_indices = @transform_2, window_bounds = array<i64: 1, 128>}, {transform_indices = @transform_3, window_bounds = array<i64: 32, 128>}]} {
    %c0 = arith.constant 0 : index
    %c0_0 = arith.constant 0 : index
    %0 = vector.load %arg1[%c0, %c0_0] : memref<32x128xbf16, #tpu.memory_space<vmem>>, vector<32x128xbf16>
    %c0_1 = arith.constant 0 : index
    %c0_2 = arith.constant 0 : index
    %1 = vector.load %arg2[%c0_1, %c0_2] : memref<128x128xbf16, #tpu.memory_space<vmem>>, vector<128x128xbf16>
    %cst = arith.constant dense<0.000000e+00> : vector<32x128xf32>
    %2 = tpu.matmul %0, %1, %cst {dimension_numbers = #tpu.dot_dimension_numbers<[1], [0], [0], [1], [0, 0, 1, 1], [], []>} : vector<32x128xbf16>, vector<128x128xbf16>, vector<32x128xf32> -> vector<32x128xf32>
    %c0_3 = arith.constant 0 : index
    %c0_4 = arith.constant 0 : index
    %3 = vector.load %arg3[%c0_3, %c0_4] : memref<1x128xf32, #tpu.memory_space<vmem>>, vector<1x128xf32>
    %4 = vector.broadcast %3 : vector<1x128xf32> to vector<32x128xf32>
    %5 = arith.addf %2, %4 : vector<32x128xf32>
    %cst_5 = arith.constant 0.000000e+00 : f32
    %6 = vector.broadcast %cst_5 : f32 to vector<32x128xf32>
    %7 = arith.maximumf %5, %6 : vector<32x128xf32>
    %8 = arith.truncf %7 : vector<32x128xf32> to vector<32x128xbf16>
    %c0_6 = arith.constant 0 : index
    %c0_7 = arith.constant 0 : index
    %9 = vector.load %arg4[%c0_6, %c0_7] : memref<32x128xbf16, #tpu.memory_space<vmem>>, vector<32x128xbf16>
    tpu.vector_store %arg4[%c0_6, %c0_7], %8 {strides = array<i32>} : memref<32x128xbf16, #tpu.memory_space<vmem>>, vector<32x128xbf16>,
    return
  }
  func.func @transform_0(%arg0: i32) -> (i32, i32) {
    %c0_i32 = arith.constant 0 : i32
    %c0_i32_0 = arith.constant 0 : i32
    return %arg0, %c0_i32 : i32, i32
  }
  func.func @transform_1(%arg0: i32) -> (i32, i32) {
    %c0_i32 = arith.constant 0 : i32
    %c0_i32_0 = arith.constant 0 : i32
    %c0_i32_1 = arith.constant 0 : i32
    return %c0_i32, %c0_i32_0 : i32, i32
  }
  func.func @transform_2(%arg0: i32) -> (i32, i32) {
    %c0_i32 = arith.constant 0 : i32
    %c0_i32_0 = arith.constant 0 : i32
    %c0_i32_1 = arith.constant 0 : i32
    return %c0_i32, %c0_i32_0 : i32, i32
  }
  func.func @transform_3(%arg0: i32) -> (i32, i32) {
    %c0_i32 = arith.constant 0 : i32
    %c0_i32_0 = arith.constant 0 : i32
    return %arg0, %c0_i32 : i32, i32
  }
}

module attributes {stable_mosaic.version = 11 : i64} {
  func.func @_gemm_bias_act_kernel(%arg0: i32, %arg1: memref<128x128xbf16, #tpu.memory_space<vmem>>, %arg2: memref<128x128xbf16, #tpu.memory_space<vmem>>, %arg3: memref<1x128xf32, #tpu.memory_space<vmem>>, %arg4: memref<128x128xf32, #tpu.memory_space<vmem>>) attributes {dimension_semantics = [#tpu.dimension_semantics<parallel>], iteration_bounds = array<i64: 1>, scalar_prefetch = 0 : i64, scratch_operands = 0 : i64, tpu.core_type = #tpu.core_type<tc>, window_params = [{transform_indices = @transform_0, window_bounds = array<i64: 128, 128>}, {pipeline_mode = #tpu.pipeline_mode<synchronous>, transform_indices = @transform_1, window_bounds = array<i64: 128, 128>}, {pipeline_mode = #tpu.pipeline_mode<synchronous>, transform_indices = @transform_2, window_bounds = array<i64: 1, 128>}, {transform_indices = @transform_3, window_bounds = array<i64: 128, 128>}]} {
    %c0 = arith.constant 0 : index
    %c0_0 = arith.constant 0 : index
    %0 = vector.load %arg1[%c0, %c0_0] : memref<128x128xbf16, #tpu.memory_space<vmem>>, vector<128x128xbf16>
    %c0_1 = arith.constant 0 : index
    %c0_2 = arith.constant 0 : index
    %1 = vector.load %arg2[%c0_1, %c0_2] : memref<128x128xbf16, #tpu.memory_space<vmem>>, vector<128x128xbf16>
    %cst = arith.constant dense<0.000000e+00> : vector<128x128xf32>
    %2 = tpu.matmul %0, %1, %cst {dimension_numbers = #tpu.dot_dimension_numbers<[1], [0], [0], [1], [0, 0, 1, 1], [], []>} : vector<128x128xbf16>, vector<128x128xbf16>, vector<128x128xf32> -> vector<128x128xf32>
    %c0_3 = arith.constant 0 : index
    %c0_4 = arith.constant 0 : index
    %3 = vector.load %arg3[%c0_3, %c0_4] : memref<1x128xf32, #tpu.memory_space<vmem>>, vector<1x128xf32>
    %4 = vector.broadcast %3 : vector<1x128xf32> to vector<128x128xf32>
    %5 = arith.addf %2, %4 : vector<128x128xf32>
    %6 = arith.negf %5 : vector<128x128xf32>
    %7 = math.exp %6 : vector<128x128xf32>
    %cst_5 = arith.constant 1.000000e+00 : f32
    %8 = vector.broadcast %cst_5 : f32 to vector<128x128xf32>
    %9 = arith.addf %8, %7 : vector<128x128xf32>
    %10 = arith.divf %8, %9 : vector<128x128xf32>
    %c0_6 = arith.constant 0 : index
    %c0_7 = arith.constant 0 : index
    %11 = vector.load %arg4[%c0_6, %c0_7] : memref<128x128xf32, #tpu.memory_space<vmem>>, vector<128x128xf32>
    tpu.vector_store %arg4[%c0_6, %c0_7], %10 {strides = array<i32>} : memref<128x128xf32, #tpu.memory_space<vmem>>, vector<128x128xf32>,
    return
  }
  func.func @transform_0(%arg0: i32) -> (i32, i32) {
    %c0_i32 = arith.constant 0 : i32
    %c0_i32_0 = arith.constant 0 : i32
    return %arg0, %c0_i32 : i32, i32
  }
  func.func @transform_1(%arg0: i32) -> (i32, i32) {
    %c0_i32 = arith.constant 0 : i32
    %c0_i32_0 = arith.constant 0 : i32
    %c0_i32_1 = arith.constant 0 : i32
    return %c0_i32, %c0_i32_0 : i32, i32
  }
  func.func @transform_2(%arg0: i32) -> (i32, i32) {
    %c0_i32 = arith.constant 0 : i32
    %c0_i32_0 = arith.constant 0 : i32
    %c0_i32_1 = arith.constant 0 : i32
    return %c0_i32, %c0_i32_0 : i32, i32
  }
  func.func @transform_3(%arg0: i32) -> (i32, i32) {
    %c0_i32 = arith.constant 0 : i32
    %c0_i32_0 = arith.constant 0 : i32
    return %arg0, %c0_i32 : i32, i32
  }
}

</mosaic_0001>

<llo_original>
// kernel: vae_forward.12
$region0: #{vae_forward.12}
  #allocation0 [shape = 'u32[]', space=smem, size = 0x4, offset = 0x4, fixed_abs, tag = 'smem constant byte address 0x4 - core index']
  #allocation1 [shape = 'u32[144,128]{1,0:T(1,128)}', space=vmem, size = 0x12000, scoped, tag = 'internal scratch']
  %s0 = inlined_call_operand.vmem [shape: bf16[128,128], index: 0, kind: input, shape index: {}]
  %s1 = inlined_call_operand.vmem [shape: bf16[128,128], index: 1, kind: input, shape index: {}]
  %s2 = inlined_call_operand.vmem [shape: f32[1,128], index: 2, kind: input, shape index: {}]
  %s3 = inlined_call_operand.vmem [shape: bf16[128,128], index: 3, kind: output, shape index: {}]
  %s4 = sld [smem:[#allocation0]]
  $region22: #{vae_forward.12} parent=0
    _
  %s6 = ssub.s32 1, %s4
  %s7 = scalar_select 0, %s6, %s4
  // Predicated region
  $region2: #{vae_forward.12} parent=0 // pred_check
    _
  $region3: #{vae_forward.12} parent=0 // pred_check_branch
    %9 = sbr.rel (0) target = $region5
  $region4: #{vae_forward.12} parent=0 // pred_region
    _
  $region5: #{vae_forward.12} parent=0 // pred_fallthru
    _
  // Predicated region
  $region6: #{vae_forward.12} parent=0 // pred_check
    _
  $region7: #{vae_forward.12} parent=0 // pred_check_branch
    %11 = sbr.rel (0) target = $region9
  $region8: #{vae_forward.12} parent=0 // pred_region
    _
  $region9: #{vae_forward.12} parent=0 // pred_fallthru
    _
  // Predicated region
  $region10: #{vae_forward.12} parent=0 // pred_check
    _
  $region11: #{vae_forward.12} parent=0 // pred_check_branch
    %13 = sbr.rel (0) target = $region13
  $region12: #{vae_forward.12} parent=0 // pred_region
    _
  $region13: #{vae_forward.12} parent=0 // pred_fallthru
    _
  %v15 = vld [vmem:[%s0] sm:$0xf]
  %v16 = vld [vmem:[%s0 + $0x4] sm:$0xf]
  %v17 = vld [vmem:[%s0 + $0x8] sm:$0xf]
  %v18 = vld [vmem:[%s0 + $0xc] sm:$0xf]
  %v19 = vld [vmem:[%s0 + $0x10] sm:$0xf]
  %v20 = vld [vmem:[%s0 + $0x14] sm:$0xf]
  %v21 = vld [vmem:[%s0 + $0x18] sm:$0xf]
  %v22 = vld [vmem:[%s0 + $0x1c] sm:$0xf]
  %v23 = vld [vmem:[%s0 + $0x20] sm:$0xf]
  %v24 = vld [vmem:[%s0 + $0x24] sm:$0xf]
  %v25 = vld [vmem:[%s0 + $0x28] sm:$0xf]
  %v26 = vld [vmem:[%s0 + $0x2c] sm:$0xf]
  %v27 = vld [vmem:[%s0 + $0x30] sm:$0xf]
  %v28 = vld [vmem:[%s0 + $0x34] sm:$0xf]
  %v29 = vld [vmem:[%s0 + $0x38] sm:$0xf]
  %v30 = vld [vmem:[%s0 + $0x3c] sm:$0xf]
  %v31 = vld [vmem:[%s1] sm:$0xf]
  %v32 = vld [vmem:[%s1 + $0x4] sm:$0xf]
  %v33 = vld [vmem:[%s1 + $0x8] sm:$0xf]
  %v34 = vld [vmem:[%s1 + $0xc] sm:$0xf]
  %v35 = vld [vmem:[%s1 + $0x10] sm:$0xf]
  %v36 = vld [vmem:[%s1 + $0x14] sm:$0xf]
  %v37 = vld [vmem:[%s1 + $0x18] sm:$0xf]
  %v38 = vld [vmem:[%s1 + $0x1c] sm:$0xf]
  %v39 = vld [vmem:[%s1 + $0x20] sm:$0xf]
  %v40 = vld [vmem:[%s1 + $0x24] sm:$0xf]
  %v41 = vld [vmem:[%s1 + $0x28] sm:$0xf]
  %v42 = vld [vmem:[%s1 + $0x2c] sm:$0xf]
  %v43 = vld [vmem:[%s1 + $0x30] sm:$0xf]
  %v44 = vld [vmem:[%s1 + $0x34] sm:$0xf]
  %v45 = vld [vmem:[%s1 + $0x38] sm:$0xf]
  %v46 = vld [vmem:[%s1 + $0x3c] sm:$0xf]
  %v47 = vld [vmem:[%s2] sm:$0x1]
  %v49 = vlaneseq
  %v50 = vshrl.u32 %v49, 7
  %v51 = vsub.s32 0, %v50
  %v52 = vrot.slane %v47, %v51
  %v70 = vunpack.c.l.b16 %v15
  %v71 = vunpack.c.l.b16 %v16
  %v72 = vunpack.c.l.b16 %v17
  %v73 = vunpack.c.l.b16 %v18
  %v74 = vunpack.c.l.b16 %v19
  %v75 = vunpack.c.l.b16 %v20
  %v76 = vunpack.c.l.b16 %v21
  %v77 = vunpack.c.l.b16 %v22
  %v78 = vunpack.c.l.b16 %v23
  %v79 = vunpack.c.l.b16 %v24
  %v80 = vunpack.c.l.b16 %v25
  %v81 = vunpack.c.l.b16 %v26
  %v82 = vunpack.c.l.b16 %v27
  %v83 = vunpack.c.l.b16 %v28
  %v84 = vunpack.c.l.b16 %v29
  %v85 = vunpack.c.l.b16 %v30
  %v86 = vpack.c.b16 %v71, %v70
  %v87 = vpack.c.b16 %v73, %v72
  %v88 = vpack.c.b16 %v75, %v74
  %v89 = vpack.c.b16 %v77, %v76
  %v90 = vpack.c.b16 %v79, %v78
  %v91 = vpack.c.b16 %v81, %v80
  %v92 = vpack.c.b16 %v83, %v82
  %v93 = vpack.c.b16 %v85, %v84
  %v118 = vunpack.c.l.b16 %v31
  %v119 = vunpack.c.l.b16 %v32
  %v120 = vunpack.c.l.b16 %v33
  %v121 = vunpack.c.l.b16 %v34
  %v122 = vunpack.c.l.b16 %v35
  %v123 = vunpack.c.l.b16 %v36
  %v124 = vunpack.c.l.b16 %v37
  %v125 = vunpack.c.l.b16 %v38
  %v126 = vunpack.c.l.b16 %v39
  %v127 = vunpack.c.l.b16 %v40
  %v128 = vunpack.c.l.b16 %v41
  %v129 = vunpack.c.l.b16 %v42
  %v130 = vunpack.c.l.b16 %v43
  %v131 = vunpack.c.l.b16 %v44
  %v132 = vunpack.c.l.b16 %v45
  %v133 = vunpack.c.l.b16 %v46
  %v134 = vpack.c.b16 %v119, %v118
  %v135 = vpack.c.b16 %v121, %v120
  %v136 = vpack.c.b16 %v123, %v122
  %v137 = vpack.c.b16 %v125, %v124
  %v138 = vpack.c.b16 %v127, %v126
  %v139 = vpack.c.b16 %v129, %v128
  %v140 = vpack.c.b16 %v131, %v130
  %v141 = vpack.c.b16 %v133, %v132
  %150 = vmatprep.subr.bf16.mxu0 0
  %151 = vmatpush1.bf16.msra.mxu0 %v134
  %152 = vmatprep.subr.bf16.mxu0 0
  %153 = vmatpush1.bf16.msra.mxu0 %v135
  %154 = vmatprep.subr.bf16.mxu0 0
  %155 = vmatpush1.bf16.msra.mxu0 %v136
  %156 = vmatprep.subr.bf16.mxu0 0
  %157 = vmatpush1.bf16.msra.mxu0 %v137
  %158 = vmatprep.subr.bf16.mxu0 0
  %159 = vmatpush1.bf16.msra.mxu0 %v138
  %160 = vmatprep.subr.bf16.mxu0 0
  %161 = vmatpush1.bf16.msra.mxu0 %v139
  %162 = vmatprep.subr.bf16.mxu0 0
  %163 = vmatpush1.bf16.msra.mxu0 %v140
  %164 = vmatprep.subr.bf16.mxu0 0
  %165 = vmatpush1.bf16.msra.mxu0 %v141
  %166 = vmatprep.subr.bf16.mxu0 0
  %167 = vmatpush1.bf16.msra.mxu0 0
  %168 = vmatprep.subr.bf16.mxu0 0
  %169 = vmatpush1.bf16.msra.mxu0 0
  %170 = vmatprep.subr.bf16.mxu0 0
  %171 = vmatpush1.bf16.msra.mxu0 0
  %172 = vmatprep.subr.bf16.mxu0 0
  %173 = vmatpush1.bf16.msra.mxu0 0
  %174 = vmatprep.subr.bf16.mxu0 0
  %175 = vmatpush1.bf16.msra.mxu0 0
  %176 = vmatprep.subr.bf16.mxu0 0
  %177 = vmatpush1.bf16.msra.mxu0 0
  %178 = vmatprep.subr.bf16.mxu0 0
  %179 = vmatpush1.bf16.msra.mxu0 0
  %180 = vmatprep.subr.bf16.mxu0 0
  %181 = vmatpush1.bf16.msra.mxu0 0
  %182 = vmatprep.mubr.bf16.mxu0 0
  %183 = vmatmul.mubr.bf16.gmra.mrb[0].mxu0 %v86
  %v184 = vpop.f32.mrb[0].mxu0
  %v185 = vadd.f32 %v52, %v184
  %v186 = vpop.f32.mrb[0].mxu0
  %v187 = vpop.f32.mrb[0].mxu0
  %v188 = vadd.f32 %v52, %v187
  %v189 = vpop.f32.mrb[0].mxu0
  %190 = vmatprep.mubr.bf16.mxu0 0
  %191 = vmatmul.mubr.bf16.gmra.mrb[0].mxu0 %v87
  %v192 = vpop.f32.mrb[0].mxu0
  %v193 = vadd.f32 %v52, %v192
  %v194 = vpop.f32.mrb[0].mxu0
  %v195 = vpop.f32.mrb[0].mxu0
  %v196 = vadd.f32 %v52, %v195
  %v197 = vpop.f32.mrb[0].mxu0
  %198 = vmatprep.mubr.bf16.mxu0 0
  %199 = vmatmul.mubr.bf16.gmra.mrb[0].mxu0 %v88
  %v200 = vpop.f32.mrb[0].mxu0
  %v201 = vadd.f32 %v52, %v200
  %v202 = vpop.f32.mrb[0].mxu0
  %v203 = vpop.f32.mrb[0].mxu0
  %v204 = vadd.f32 %v52, %v203
  %v205 = vpop.f32.mrb[0].mxu0
  %206 = vmatprep.mubr.bf16.mxu0 0
  %207 = vmatmul.mubr.bf16.gmra.mrb[0].mxu0 %v89
  %v208 = vpop.f32.mrb[0].mxu0
  %v209 = vadd.f32 %v52, %v208
  %v210 = vpop.f32.mrb[0].mxu0
  %v211 = vpop.f32.mrb[0].mxu0
  %v212 = vadd.f32 %v52, %v211
  %v213 = vpop.f32.mrb[0].mxu0
  %214 = vmatprep.mubr.bf16.mxu0 0
  %215 = vmatmul.mubr.bf16.gmra.mrb[0].mxu0 %v90
  %v216 = vpop.f32.mrb[0].mxu0
  %v217 = vadd.f32 %v52, %v216
  %v218 = vpop.f32.mrb[0].mxu0
  %v219 = vpop.f32.mrb[0].mxu0
  %v220 = vadd.f32 %v52, %v219
  %v221 = vpop.f32.mrb[0].mxu0
  %222 = vmatprep.mubr.bf16.mxu0 0
  %223 = vmatmul.mubr.bf16.gmra.mrb[0].mxu0 %v91
  %v224 = vpop.f32.mrb[0].mxu0
  %v225 = vadd.f32 %v52, %v224
  %v226 = vpop.f32.mrb[0].mxu0
  %v227 = vpop.f32.mrb[0].mxu0
  %v228 = vadd.f32 %v52, %v227
  %v229 = vpop.f32.mrb[0].mxu0
  %230 = vmatprep.mubr.bf16.mxu0 0
  %231 = vmatmul.mubr.bf16.gmra.mrb[0].mxu0 %v92
  %v232 = vpop.f32.mrb[0].mxu0
  %v233 = vadd.f32 %v52, %v232
  %v234 = vpop.f32.mrb[0].mxu0
  %v235 = vpop.f32.mrb[0].mxu0
  %v236 = vadd.f32 %v52, %v235
  %v237 = vpop.f32.mrb[0].mxu0
  %238 = vmatprep.mubr.bf16.mxu0 0
  %239 = vmatmul.mubr.bf16.gmra.mrb[0].mxu0 %v93
  %v240 = vpop.f32.mrb[0].mxu0
  %v241 = vadd.f32 %v52, %v240
  %v242 = vpop.f32.mrb[0].mxu0
  %v243 = vpop.f32.mrb[0].mxu0
  %v244 = vadd.f32 %v52, %v243
  %v245 = vpop.f32.mrb[0].mxu0
  %246 = vdwg.mxu0
  %v247 = vmax.f32 %v185, 0.0
  %v248 = vmax.f32 %v188, 0.0
  %v249 = vmax.f32 %v193, 0.0
  %v250 = vmax.f32 %v196, 0.0
  %v251 = vmax.f32 %v201, 0.0
  %v252 = vmax.f32 %v204, 0.0
  %v253 = vmax.f32 %v209, 0.0
  %v254 = vmax.f32 %v212, 0.0
  %v255 = vmax.f32 %v217, 0.0
  %v256 = vmax.f32 %v220, 0.0
  %v257 = vmax.f32 %v225, 0.0
  %v258 = vmax.f32 %v228, 0.0
  %v259 = vmax.f32 %v233, 0.0
  %v260 = vmax.f32 %v236, 0.0
  %v261 = vmax.f32 %v241, 0.0
  %v262 = vmax.f32 %v244, 0.0
  %v263 = vpack.c.bf16 %v248, %v247
  %v264 = vpack.c.bf16 %v250, %v249
  %v265 = vpack.c.bf16 %v252, %v251
  %v266 = vpack.c.bf16 %v254, %v253
  %v267 = vpack.c.bf16 %v256, %v255
  %v268 = vpack.c.bf16 %v258, %v257
  %v269 = vpack.c.bf16 %v260, %v259
  %v270 = vpack.c.bf16 %v262, %v261
  %v279 = vunpack.c.l.b16 %v263
  %v280 = vunpack.c.h.b16 %v263
  %v281 = vunpack.c.l.b16 %v264
  %v282 = vunpack.c.h.b16 %v264
  %v283 = vunpack.c.l.b16 %v265
  %v284 = vunpack.c.h.b16 %v265
  %v285 = vunpack.c.l.b16 %v266
  %v286 = vunpack.c.h.b16 %v266
  %v287 = vunpack.c.l.b16 %v267
  %v288 = vunpack.c.h.b16 %v267
  %v289 = vunpack.c.l.b16 %v268
  %v290 = vunpack.c.h.b16 %v268
  %v291 = vunpack.c.l.b16 %v269
  %v292 = vunpack.c.h.b16 %v269
  %v293 = vunpack.c.l.b16 %v270
  %v294 = vunpack.c.h.b16 %v270
  %v295 = vpack.c.b16 %v279, %v279
  %v296 = vpack.c.b16 %v280, %v280
  %v297 = vpack.c.b16 %v281, %v281
  %v298 = vpack.c.b16 %v282, %v282
  %v299 = vpack.c.b16 %v283, %v283
  %v300 = vpack.c.b16 %v284, %v284
  %v301 = vpack.c.b16 %v285, %v285
  %v302 = vpack.c.b16 %v286, %v286
  %v303 = vpack.c.b16 %v287, %v287
  %v304 = vpack.c.b16 %v288, %v288
  %v305 = vpack.c.b16 %v289, %v289
  %v306 = vpack.c.b16 %v290, %v290
  %v307 = vpack.c.b16 %v291, %v291
  %v308 = vpack.c.b16 %v292, %v292
  %v309 = vpack.c.b16 %v293, %v293
  %v310 = vpack.c.b16 %v294, %v294
  %327 = vst [vmem:[%s3] sm:$0xf] %v295
  %328 = vst [vmem:[%s3 + $0x4] sm:$0xf] %v296
  %329 = vst [vmem:[%s3 + $0x8] sm:$0xf] %v297
  %330 = vst [vmem:[%s3 + $0xc] sm:$0xf] %v298
  %331 = vst [vmem:[%s3 + $0x10] sm:$0xf] %v299
  %332 = vst [vmem:[%s3 + $0x14] sm:$0xf] %v300
  %333 = vst [vmem:[%s3 + $0x18] sm:$0xf] %v301
  %334 = vst [vmem:[%s3 + $0x1c] sm:$0xf] %v302
  %335 = vst [vmem:[%s3 + $0x20] sm:$0xf] %v303
  %336 = vst [vmem:[%s3 + $0x24] sm:$0xf] %v304
  %337 = vst [vmem:[%s3 + $0x28] sm:$0xf] %v305
  %338 = vst [vmem:[%s3 + $0x2c] sm:$0xf] %v306
  %339 = vst [vmem:[%s3 + $0x30] sm:$0xf] %v307
  %340 = vst [vmem:[%s3 + $0x34] sm:$0xf] %v308
  %341 = vst [vmem:[%s3 + $0x38] sm:$0xf] %v309
  %342 = vst [vmem:[%s3 + $0x3c] sm:$0xf] %v310
  // Predicated region
  $region14: #{vae_forward.12} parent=0 // pred_check
    _
  $region15: #{vae_forward.12} parent=0 // pred_check_branch
    %344 = sbr.rel (0) target = $region17
  $region16: #{vae_forward.12} parent=0 // pred_region
    _
  $region17: #{vae_forward.12} parent=0 // pred_fallthru
    _
  // Predicated region
  $region18: #{vae_forward.12} parent=0 // pred_check
    _
  $region19: #{vae_forward.12} parent=0 // pred_check_branch
    %346 = sbr.rel (0) target = $region21
  $region20: #{vae_forward.12} parent=0 // pred_region
    _
  $region21: #{vae_forward.12} parent=0 // pred_fallthru
    _

// kernel: vae_forward.13
$region0: #{vae_forward.13}
  #allocation0 [shape = 'u32[]', space=smem, size = 0x4, offset = 0x4, fixed_abs, tag = 'smem constant byte address 0x4 - core index']
  #allocation1 [shape = 'u32[144,128]{1,0:T(1,128)}', space=vmem, size = 0x12000, scoped, tag = 'internal scratch']
  %s0 = inlined_call_operand.vmem [shape: bf16[32,256], index: 0, kind: input, shape index: {}]
  %s1 = inlined_call_operand.vmem [shape: bf16[256,128], index: 1, kind: input, shape index: {}]
  %s2 = inlined_call_operand.vmem [shape: f32[1,128], index: 2, kind: input, shape index: {}]
  %s3 = inlined_call_operand.vmem [shape: bf16[32,128], index: 3, kind: output, shape index: {}]
  %s4 = sld [smem:[#allocation0]]
  $region22: #{vae_forward.13} parent=0
    _
  %s6 = ssub.s32 1, %s4
  %s7 = scalar_select 0, %s6, %s4
  // Predicated region
  $region2: #{vae_forward.13} parent=0 // pred_check
    _
  $region3: #{vae_forward.13} parent=0 // pred_check_branch
    %9 = sbr.rel (0) target = $region5
  $region4: #{vae_forward.13} parent=0 // pred_region
    _
  $region5: #{vae_forward.13} parent=0 // pred_fallthru
    _
  // Predicated region
  $region6: #{vae_forward.13} parent=0 // pred_check
    _
  $region7: #{vae_forward.13} parent=0 // pred_check_branch
    %11 = sbr.rel (0) target = $region9
  $region8: #{vae_forward.13} parent=0 // pred_region
    _
  $region9: #{vae_forward.13} parent=0 // pred_fallthru
    _
  // Predicated region
  $region10: #{vae_forward.13} parent=0 // pred_check
    _
  $region11: #{vae_forward.13} parent=0 // pred_check_branch
    %13 = sbr.rel (0) target = $region13
  $region12: #{vae_forward.13} parent=0 // pred_region
    _
  $region13: #{vae_forward.13} parent=0 // pred_fallthru
    _
  %v15 = vld [vmem:[%s0] sm:$0xff]
  %v16 = vld [vmem:[%s0 + $0x8] sm:$0xff]
  %v17 = vld [vmem:[%s0 + $0x10] sm:$0xff]
  %v18 = vld [vmem:[%s0 + $0x18] sm:$0xff]
  %v19 = vld [vmem:[%s1] sm:$0xf]
  %v20 = vld [vmem:[%s1 + $0x4] sm:$0xf]
  %v21 = vld [vmem:[%s1 + $0x8] sm:$0xf]
  %v22 = vld [vmem:[%s1 + $0xc] sm:$0xf]
  %v23 = vld [vmem:[%s1 + $0x10] sm:$0xf]
  %v24 = vld [vmem:[%s1 + $0x14] sm:$0xf]
  %v25 = vld [vmem:[%s1 + $0x18] sm:$0xf]
  %v26 = vld [vmem:[%s1 + $0x1c] sm:$0xf]
  %v27 = vld [vmem:[%s1 + $0x20] sm:$0xf]
  %v28 = vld [vmem:[%s1 + $0x24] sm:$0xf]
  %v29 = vld [vmem:[%s1 + $0x28] sm:$0xf]
  %v30 = vld [vmem:[%s1 + $0x2c] sm:$0xf]
  %v31 = vld [vmem:[%s1 + $0x30] sm:$0xf]
  %v32 = vld [vmem:[%s1 + $0x34] sm:$0xf]
  %v33 = vld [vmem:[%s1 + $0x38] sm:$0xf]
  %v34 = vld [vmem:[%s1 + $0x3c] sm:$0xf]
  %v35 = vld [vmem:[%s1 + $0x40] sm:$0xf]
  %v36 = vld [vmem:[%s1 + $0x44] sm:$0xf]
  %v37 = vld [vmem:[%s1 + $0x48] sm:$0xf]
  %v38 = vld [vmem:[%s1 + $0x4c] sm:$0xf]
  %v39 = vld [vmem:[%s1 + $0x50] sm:$0xf]
  %v40 = vld [vmem:[%s1 + $0x54] sm:$0xf]
  %v41 = vld [vmem:[%s1 + $0x58] sm:$0xf]
  %v42 = vld [vmem:[%s1 + $0x5c] sm:$0xf]
  %v43 = vld [vmem:[%s1 + $0x60] sm:$0xf]
  %v44 = vld [vmem:[%s1 + $0x64] sm:$0xf]
  %v45 = vld [vmem:[%s1 + $0x68] sm:$0xf]
  %v46 = vld [vmem:[%s1 + $0x6c] sm:$0xf]
  %v47 = vld [vmem:[%s1 + $0x70] sm:$0xf]
  %v48 = vld [vmem:[%s1 + $0x74] sm:$0xf]
  %v49 = vld [vmem:[%s1 + $0x78] sm:$0xf]
  %v50 = vld [vmem:[%s1 + $0x7c] sm:$0xf]
  %v51 = vld [vmem:[%s2] sm:$0x1]
  %v53 = vlaneseq
  %v54 = vshrl.u32 %v53, 7
  %v55 = vsub.s32 0, %v54
  %v56 = vrot.slane %v51, %v55
  %v62 = vunpack.c.l.b16 %v15
  %v63 = vunpack.c.h.b16 %v15
  %v64 = vunpack.c.l.b16 %v16
  %v65 = vunpack.c.h.b16 %v16
  %v66 = vunpack.c.l.b16 %v17
  %v67 = vunpack.c.h.b16 %v17
  %v68 = vunpack.c.l.b16 %v18
  %v69 = vunpack.c.h.b16 %v18
  %v70 = vpack.c.b16 %v64, %v62
  %v71 = vpack.c.b16 %v65, %v63
  %v72 = vpack.c.b16 %v68, %v66
  %v73 = vpack.c.b16 %v69, %v67
  %v110 = vunpack.c.l.b16 %v19
  %v111 = vunpack.c.l.b16 %v20
  %v112 = vunpack.c.l.b16 %v21
  %v113 = vunpack.c.l.b16 %v22
  %v114 = vunpack.c.l.b16 %v23
  %v115 = vunpack.c.l.b16 %v24
  %v116 = vunpack.c.l.b16 %v25
  %v117 = vunpack.c.l.b16 %v26
  %v118 = vunpack.c.l.b16 %v27
  %v119 = vunpack.c.l.b16 %v28
  %v120 = vunpack.c.l.b16 %v29
  %v121 = vunpack.c.l.b16 %v30
  %v122 = vunpack.c.l.b16 %v31
  %v123 = vunpack.c.l.b16 %v32
  %v124 = vunpack.c.l.b16 %v33
  %v125 = vunpack.c.l.b16 %v34
  %v126 = vunpack.c.l.b16 %v35
  %v127 = vunpack.c.l.b16 %v36
  %v128 = vunpack.c.l.b16 %v37
  %v129 = vunpack.c.l.b16 %v38
  %v130 = vunpack.c.l.b16 %v39
  %v131 = vunpack.c.l.b16 %v40
  %v132 = vunpack.c.l.b16 %v41
  %v133 = vunpack.c.l.b16 %v42
  %v134 = vunpack.c.l.b16 %v43
  %v135 = vunpack.c.l.b16 %v44
  %v136 = vunpack.c.l.b16 %v45
  %v137 = vunpack.c.l.b16 %v46
  %v138 = vunpack.c.l.b16 %v47
  %v139 = vunpack.c.l.b16 %v48
  %v140 = vunpack.c.l.b16 %v49
  %v141 = vunpack.c.l.b16 %v50
  %v142 = vpack.c.b16 %v111, %v110
  %v143 = vpack.c.b16 %v113, %v112
  %v144 = vpack.c.b16 %v115, %v114
  %v145 = vpack.c.b16 %v117, %v116
  %v146 = vpack.c.b16 %v119, %v118
  %v147 = vpack.c.b16 %v121, %v120
  %v148 = vpack.c.b16 %v123, %v122
  %v149 = vpack.c.b16 %v125, %v124
  %v150 = vpack.c.b16 %v127, %v126
  %v151 = vpack.c.b16 %v129, %v128
  %v152 = vpack.c.b16 %v131, %v130
  %v153 = vpack.c.b16 %v133, %v132
  %v154 = vpack.c.b16 %v135, %v134
  %v155 = vpack.c.b16 %v137, %v136
  %v156 = vpack.c.b16 %v139, %v138
  %v157 = vpack.c.b16 %v141, %v140
  %174 = vmatprep.subr.bf16.mxu0 0
  %175 = vmatpush1.bf16.msra.mxu0 %v142
  %176 = vmatprep.subr.bf16.mxu0 0
  %177 = vmatpush1.bf16.msra.mxu0 %v143
  %178 = vmatprep.subr.bf16.mxu0 0
  %179 = vmatpush1.bf16.msra.mxu0 %v144
  %180 = vmatprep.subr.bf16.mxu0 0
  %181 = vmatpush1.bf16.msra.mxu0 %v145
  %182 = vmatprep.subr.bf16.mxu0 0
  %183 = vmatpush1.bf16.msra.mxu0 %v146
  %184 = vmatprep.subr.bf16.mxu0 0
  %185 = vmatpush1.bf16.msra.mxu0 %v147
  %186 = vmatprep.subr.bf16.mxu0 0
  %187 = vmatpush1.bf16.msra.mxu0 %v148
  %188 = vmatprep.subr.bf16.mxu0 0
  %189 = vmatpush1.bf16.msra.mxu0 %v149
  %190 = vmatprep.subr.bf16.mxu0 0
  %191 = vmatpush1.bf16.msra.mxu0 %v150
  %192 = vmatprep.subr.bf16.mxu0 0
  %193 = vmatpush1.bf16.msra.mxu0 %v151
  %194 = vmatprep.subr.bf16.mxu0 0
  %195 = vmatpush1.bf16.msra.mxu0 %v152
  %196 = vmatprep.subr.bf16.mxu0 0
  %197 = vmatpush1.bf16.msra.mxu0 %v153
  %198 = vmatprep.subr.bf16.mxu0 0
  %199 = vmatpush1.bf16.msra.mxu0 %v154
  %200 = vmatprep.subr.bf16.mxu0 0
  %201 = vmatpush1.bf16.msra.mxu0 %v155
  %202 = vmatprep.subr.bf16.mxu0 0
  %203 = vmatpush1.bf16.msra.mxu0 %v156
  %204 = vmatprep.subr.bf16.mxu0 0
  %205 = vmatpush1.bf16.msra.mxu0 %v157
  %206 = vmatprep.mubr.bf16.mxu0 %v71
  %207 = vmatmul.mubr.bf16.gmra.mrb[0].mxu0 %v70
  %v208 = vpop.f32.mrb[0].mxu0
  %v209 = vadd.f32 %v56, %v208
  %v210 = vpop.f32.mrb[0].mxu0
  %v211 = vpop.f32.mrb[0].mxu0
  %v212 = vadd.f32 %v56, %v211
  %v213 = vpop.f32.mrb[0].mxu0
  %214 = vmatprep.mubr.bf16.mxu0 %v73
  %215 = vmatmul.mubr.bf16.gmra.mrb[0].mxu0 %v72
  %v216 = vpop.f32.mrb[0].mxu0
  %v217 = vadd.f32 %v56, %v216
  %v218 = vpop.f32.mrb[0].mxu0
  %v219 = vpop.f32.mrb[0].mxu0
  %v220 = vadd.f32 %v56, %v219
  %v221 = vpop.f32.mrb[0].mxu0
  %222 = vdwg.mxu0
  %v223 = vmax.f32 %v209, 0.0
  %v224 = vmax.f32 %v212, 0.0
  %v225 = vmax.f32 %v217, 0.0
  %v226 = vmax.f32 %v220, 0.0
  %v227 = vpack.c.bf16 %v224, %v223
  %v228 = vpack.c.bf16 %v226, %v225
  %v231 = vunpack.c.l.b16 %v227
  %v232 = vunpack.c.h.b16 %v227
  %v233 = vunpack.c.l.b16 %v228
  %v234 = vunpack.c.h.b16 %v228
  %v235 = vpack.c.b16 %v231, %v231
  %v236 = vpack.c.b16 %v232, %v232
  %v237 = vpack.c.b16 %v233, %v233
  %v238 = vpack.c.b16 %v234, %v234
  %243 = vst [vmem:[%s3] sm:$0xf] %v235
  %244 = vst [vmem:[%s3 + $0x4] sm:$0xf] %v236
  %245 = vst [vmem:[%s3 + $0x8] sm:$0xf] %v237
  %246 = vst [vmem:[%s3 + $0xc] sm:$0xf] %v238
  // Predicated region
  $region14: #{vae_forward.13} parent=0 // pred_check
    _
  $region15: #{vae_forward.13} parent=0 // pred_check_branch
    %248 = sbr.rel (0) target = $region17
  $region16: #{vae_forward.13} parent=0 // pred_region
    _
  $region17: #{vae_forward.13} parent=0 // pred_fallthru
    _
  // Predicated region
  $region18: #{vae_forward.13} parent=0 // pred_check
    _
  $region19: #{vae_forward.13} parent=0 // pred_check_branch
    %250 = sbr.rel (0) target = $region21
  $region20: #{vae_forward.13} parent=0 // pred_region
    _
  $region21: #{vae_forward.13} parent=0 // pred_fallthru
    _

// kernel: vae_forward.15
$region0: #{vae_forward.15}
  #allocation0 [shape = 'u32[]', space=smem, size = 0x4, offset = 0x4, fixed_abs, tag = 'smem constant byte address 0x4 - core index']
  #allocation1 [shape = 'u32[144,128]{1,0:T(1,128)}', space=vmem, size = 0x12000, scoped, tag = 'internal scratch']
  %s0 = inlined_call_operand.vmem [shape: bf16[16,128], index: 0, kind: input, shape index: {}]
  %s1 = inlined_call_operand.vmem [shape: bf16[128,512], index: 1, kind: input, shape index: {}]
  %s2 = inlined_call_operand.vmem [shape: f32[1,512], index: 2, kind: input, shape index: {}]
  %s3 = inlined_call_operand.vmem [shape: bf16[16,512], index: 3, kind: output, shape index: {}]
  %s4 = sld [smem:[#allocation0]]
  $region22: #{vae_forward.15} parent=0
    _
  %s6 = ssub.s32 1, %s4
  %s7 = scalar_select 0, %s6, %s4
  // Predicated region
  $region2: #{vae_forward.15} parent=0 // pred_check
    _
  $region3: #{vae_forward.15} parent=0 // pred_check_branch
    %9 = sbr.rel (0) target = $region5
  $region4: #{vae_forward.15} parent=0 // pred_region
    _
  $region5: #{vae_forward.15} parent=0 // pred_fallthru
    _
  // Predicated region
  $region6: #{vae_forward.15} parent=0 // pred_check
    _
  $region7: #{vae_forward.15} parent=0 // pred_check_branch
    %11 = sbr.rel (0) target = $region9
  $region8: #{vae_forward.15} parent=0 // pred_region
    _
  $region9: #{vae_forward.15} parent=0 // pred_fallthru
    _
  // Predicated region
  $region10: #{vae_forward.15} parent=0 // pred_check
    _
  $region11: #{vae_forward.15} parent=0 // pred_check_branch
    %13 = sbr.rel (0) target = $region13
  $region12: #{vae_forward.15} parent=0 // pred_region
    _
  $region13: #{vae_forward.15} parent=0 // pred_fallthru
    _
  %v15 = vld [vmem:[%s0] sm:$0xf]
  %v16 = vld [vmem:[%s0 + $0x4] sm:$0xf]
  %v17 = vld [vmem:[%s1] sm:$0xff]
  %v18 = vld [vmem:[%s1 + $0x8] sm:$0xff]
  %v19 = vld [vmem:[%s1 + $0x10] sm:$0xff]
  %v20 = vld [vmem:[%s1 + $0x18] sm:$0xff]
  %v21 = vld [vmem:[%s1 + $0x20] sm:$0xff]
  %v22 = vld [vmem:[%s1 + $0x28] sm:$0xff]
  %v23 = vld [vmem:[%s1 + $0x30] sm:$0xff]
  %v24 = vld [vmem:[%s1 + $0x38] sm:$0xff]
  %v25 = vld [vmem:[%s1 + $0x40] sm:$0xff]
  %v26 = vld [vmem:[%s1 + $0x48] sm:$0xff]
  %v27 = vld [vmem:[%s1 + $0x50] sm:$0xff]
  %v28 = vld [vmem:[%s1 + $0x58] sm:$0xff]
  %v29 = vld [vmem:[%s1 + $0x60] sm:$0xff]
  %v30 = vld [vmem:[%s1 + $0x68] sm:$0xff]
  %v31 = vld [vmem:[%s1 + $0x70] sm:$0xff]
  %v32 = vld [vmem:[%s1 + $0x78] sm:$0xff]
  %v33 = vld [vmem:[%s1 + $0x80] sm:$0xff]
  %v34 = vld [vmem:[%s1 + $0x88] sm:$0xff]
  %v35 = vld [vmem:[%s1 + $0x90] sm:$0xff]
  %v36 = vld [vmem:[%s1 + $0x98] sm:$0xff]
  %v37 = vld [vmem:[%s1 + $0xa0] sm:$0xff]
  %v38 = vld [vmem:[%s1 + $0xa8] sm:$0xff]
  %v39 = vld [vmem:[%s1 + $0xb0] sm:$0xff]
  %v40 = vld [vmem:[%s1 + $0xb8] sm:$0xff]
  %v41 = vld [vmem:[%s1 + $0xc0] sm:$0xff]
  %v42 = vld [vmem:[%s1 + $0xc8] sm:$0xff]
  %v43 = vld [vmem:[%s1 + $0xd0] sm:$0xff]
  %v44 = vld [vmem:[%s1 + $0xd8] sm:$0xff]
  %v45 = vld [vmem:[%s1 + $0xe0] sm:$0xff]
  %v46 = vld [vmem:[%s1 + $0xe8] sm:$0xff]
  %v47 = vld [vmem:[%s1 + $0xf0] sm:$0xff]
  %v48 = vld [vmem:[%s1 + $0xf8] sm:$0xff]
  %v49 = vld [vmem:[%s2] sm:$0xf]
  %v51 = vlaneseq
  %v52 = vshrl.u32 %v51, 7
  %v53 = vsub.s32 0, %v52
  %v54 = vrot.slane %v49, %v53
  %v55 = vlaneseq
  %v56 = vshrl.u32 %v55, 7
  %v57 = vsub.s32 1, %v56
  %v58 = vrot.slane %v49, %v57
  %v59 = vlaneseq
  %v60 = vshrl.u32 %v59, 7
  %v61 = vsub.s32 2, %v60
  %v62 = vrot.slane %v49, %v61
  %v63 = vlaneseq
  %v64 = vshrl.u32 %v63, 7
  %v65 = vsub.s32 3, %v64
  %v66 = vrot.slane %v49, %v65
  %v73 = vunpack.c.l.b16 %v15
  %v74 = vunpack.c.l.b16 %v16
  %v75 = vpack.c.b16 %v74, %v73
  %v109 = vunpack.c.l.b16 %v17
  %v110 = vunpack.c.h.b16 %v17
  %v111 = vunpack.c.l.b16 %v18
  %v112 = vunpack.c.h.b16 %v18
  %v113 = vunpack.c.l.b16 %v19
  %v114 = vunpack.c.h.b16 %v19
  %v115 = vunpack.c.l.b16 %v20
  %v116 = vunpack.c.h.b16 %v20
  %v117 = vunpack.c.l.b16 %v21
  %v118 = vunpack.c.h.b16 %v21
  %v119 = vunpack.c.l.b16 %v22
  %v120 = vunpack.c.h.b16 %v22
  %v121 = vunpack.c.l.b16 %v23
  %v122 = vunpack.c.h.b16 %v23
  %v123 = vunpack.c.l.b16 %v24
  %v124 = vunpack.c.h.b16 %v24
  %v125 = vunpack.c.l.b16 %v25
  %v126 = vunpack.c.h.b16 %v25
  %v127 = vunpack.c.l.b16 %v26
  %v128 = vunpack.c.h.b16 %v26
  %v129 = vunpack.c.l.b16 %v27
  %v130 = vunpack.c.h.b16 %v27
  %v131 = vunpack.c.l.b16 %v28
  %v132 = vunpack.c.h.b16 %v28
  %v133 = vunpack.c.l.b16 %v29
  %v134 = vunpack.c.h.b16 %v29
  %v135 = vunpack.c.l.b16 %v30
  %v136 = vunpack.c.h.b16 %v30
  %v137 = vunpack.c.l.b16 %v31
  %v138 = vunpack.c.h.b16 %v31
  %v139 = vunpack.c.l.b16 %v32
  %v140 = vunpack.c.h.b16 %v32
  %v141 = vunpack.c.l.b16 %v33
  %v142 = vunpack.c.h.b16 %v33
  %v143 = vunpack.c.l.b16 %v34
  %v144 = vunpack.c.h.b16 %v34
  %v145 = vunpack.c.l.b16 %v35
  %v146 = vunpack.c.h.b16 %v35
  %v147 = vunpack.c.l.b16 %v36
  %v148 = vunpack.c.h.b16 %v36
  %v149 = vunpack.c.l.b16 %v37
  %v150 = vunpack.c.h.b16 %v37
  %v151 = vunpack.c.l.b16 %v38
  %v152 = vunpack.c.h.b16 %v38
  %v153 = vunpack.c.l.b16 %v39
  %v154 = vunpack.c.h.b16 %v39
  %v155 = vunpack.c.l.b16 %v40
  %v156 = vunpack.c.h.b16 %v40
  %v157 = vunpack.c.l.b16 %v41
  %v158 = vunpack.c.h.b16 %v41
  %v159 = vunpack.c.l.b16 %v42
  %v160 = vunpack.c.h.b16 %v42
  %v161 = vunpack.c.l.b16 %v43
  %v162 = vunpack.c.h.b16 %v43
  %v163 = vunpack.c.l.b16 %v44
  %v164 = vunpack.c.h.b16 %v44
  %v165 = vunpack.c.l.b16 %v45
  %v166 = vunpack.c.h.b16 %v45
  %v167 = vunpack.c.l.b16 %v46
  %v168 = vunpack.c.h.b16 %v46
  %v169 = vunpack.c.l.b16 %v47
  %v170 = vunpack.c.h.b16 %v47
  %v171 = vunpack.c.l.b16 %v48
  %v172 = vunpack.c.h.b16 %v48
  %v173 = vpack.c.b16 %v113, %v109
  %v174 = vpack.c.b16 %v114, %v110
  %v175 = vpack.c.b16 %v115, %v111
  %v176 = vpack.c.b16 %v116, %v112
  %v177 = vpack.c.b16 %v121, %v117
  %v178 = vpack.c.b16 %v122, %v118
  %v179 = vpack.c.b16 %v123, %v119
  %v180 = vpack.c.b16 %v124, %v120
  %v181 = vpack.c.b16 %v129, %v125
  %v182 = vpack.c.b16 %v130, %v126
  %v183 = vpack.c.b16 %v131, %v127
  %v184 = vpack.c.b16 %v132, %v128
  %v185 = vpack.c.b16 %v137, %v133
  %v186 = vpack.c.b16 %v138, %v134
  %v187 = vpack.c.b16 %v139, %v135
  %v188 = vpack.c.b16 %v140, %v136
  %v189 = vpack.c.b16 %v145, %v141
  %v190 = vpack.c.b16 %v146, %v142
  %v191 = vpack.c.b16 %v147, %v143
  %v192 = vpack.c.b16 %v148, %v144
  %v193 = vpack.c.b16 %v153, %v149
  %v194 = vpack.c.b16 %v154, %v150
  %v195 = vpack.c.b16 %v155, %v151
  %v196 = vpack.c.b16 %v156, %v152
  %v197 = vpack.c.b16 %v161, %v157
  %v198 = vpack.c.b16 %v162, %v158
  %v199 = vpack.c.b16 %v163, %v159
  %v200 = vpack.c.b16 %v164, %v160
  %v201 = vpack.c.b16 %v169, %v165
  %v202 = vpack.c.b16 %v170, %v166
  %v203 = vpack.c.b16 %v171, %v167
  %v204 = vpack.c.b16 %v172, %v168
  %237 = vmatprep.subr.bf16.mxu0 %v174
  %238 = vmatpush1.bf16.msra.mxu0 %v173
  %239 = vmatprep.subr.bf16.mxu0 %v178
  %240 = vmatpush1.bf16.msra.mxu0 %v177
  %241 = vmatprep.subr.bf16.mxu0 %v182
  %242 = vmatpush1.bf16.msra.mxu0 %v181
  %243 = vmatprep.subr.bf16.mxu0 %v186
  %244 = vmatpush1.bf16.msra.mxu0 %v185
  %245 = vmatprep.subr.bf16.mxu0 %v190
  %246 = vmatpush1.bf16.msra.mxu0 %v189
  %247 = vmatprep.subr.bf16.mxu0 %v194
  %248 = vmatpush1.bf16.msra.mxu0 %v193
  %249 = vmatprep.subr.bf16.mxu0 %v198
  %250 = vmatpush1.bf16.msra.mxu0 %v197
  %251 = vmatprep.subr.bf16.mxu0 %v202
  %252 = vmatpush1.bf16.msra.mxu0 %v201
  %253 = vmatprep.subr.bf16.mxu0 0
  %254 = vmatpush1.bf16.msra.mxu0 0
  %255 = vmatprep.subr.bf16.mxu0 0
  %256 = vmatpush1.bf16.msra.mxu0 0
  %257 = vmatprep.subr.bf16.mxu0 0
  %258 = vmatpush1.bf16.msra.mxu0 0
  %259 = vmatprep.subr.bf16.mxu0 0
  %260 = vmatpush1.bf16.msra.mxu0 0
  %261 = vmatprep.subr.bf16.mxu0 0
  %262 = vmatpush1.bf16.msra.mxu0 0
  %263 = vmatprep.subr.bf16.mxu0 0
  %264 = vmatpush1.bf16.msra.mxu0 0
  %265 = vmatprep.subr.bf16.mxu0 0
  %266 = vmatpush1.bf16.msra.mxu0 0
  %267 = vmatprep.subr.bf16.mxu0 0
  %268 = vmatpush1.bf16.msra.mxu0 0
  %269 = vmatprep.mubr.bf16.mxu0 0
  %270 = vmatmul.mubr.bf16.gmra.mrb[0].mxu0 %v75
  %v271 = vpop.f32.mrb[0].mxu0
  %v272 = vadd.f32 %v54, %v271
  %v273 = vpop.f32.mrb[0].mxu0
  %v274 = vadd.f32 %v58, %v273
  %v275 = vpop.f32.mrb[0].mxu0
  %v276 = vadd.f32 %v54, %v275
  %v277 = vpop.f32.mrb[0].mxu0
  %v278 = vadd.f32 %v58, %v277
  %279 = vdwg.mxu0
  %280 = vmatprep.subr.bf16.mxu0 %v176
  %281 = vmatpush1.bf16.msra.mxu0 %v175
  %282 = vmatprep.subr.bf16.mxu0 %v180
  %283 = vmatpush1.bf16.msra.mxu0 %v179
  %284 = vmatprep.subr.bf16.mxu0 %v184
  %285 = vmatpush1.bf16.msra.mxu0 %v183
  %286 = vmatprep.subr.bf16.mxu0 %v188
  %287 = vmatpush1.bf16.msra.mxu0 %v187
  %288 = vmatprep.subr.bf16.mxu0 %v192
  %289 = vmatpush1.bf16.msra.mxu0 %v191
  %290 = vmatprep.subr.bf16.mxu0 %v196
  %291 = vmatpush1.bf16.msra.mxu0 %v195
  %292 = vmatprep.subr.bf16.mxu0 %v200
  %293 = vmatpush1.bf16.msra.mxu0 %v199
  %294 = vmatprep.subr.bf16.mxu0 %v204
  %295 = vmatpush1.bf16.msra.mxu0 %v203
  %296 = vmatprep.subr.bf16.mxu0 0
  %297 = vmatpush1.bf16.msra.mxu0 0
  %298 = vmatprep.subr.bf16.mxu0 0
  %299 = vmatpush1.bf16.msra.mxu0 0
  %300 = vmatprep.subr.bf16.mxu0 0
  %301 = vmatpush1.bf16.msra.mxu0 0
  %302 = vmatprep.subr.bf16.mxu0 0
  %303 = vmatpush1.bf16.msra.mxu0 0
  %304 = vmatprep.subr.bf16.mxu0 0
  %305 = vmatpush1.bf16.msra.mxu0 0
  %306 = vmatprep.subr.bf16.mxu0 0
  %307 = vmatpush1.bf16.msra.mxu0 0
  %308 = vmatprep.subr.bf16.mxu0 0
  %309 = vmatpush1.bf16.msra.mxu0 0
  %310 = vmatprep.subr.bf16.mxu0 0
  %311 = vmatpush1.bf16.msra.mxu0 0
  %312 = vmatprep.mubr.bf16.mxu0 0
  %313 = vmatmul.mubr.bf16.gmra.mrb[0].mxu0 %v75
  %v314 = vpop.f32.mrb[0].mxu0
  %v315 = vadd.f32 %v62, %v314
  %v316 = vpop.f32.mrb[0].mxu0
  %v317 = vadd.f32 %v66, %v316
  %v318 = vpop.f32.mrb[0].mxu0
  %v319 = vadd.f32 %v62, %v318
  %v320 = vpop.f32.mrb[0].mxu0
  %v321 = vadd.f32 %v66, %v320
  %322 = vdwg.mxu0
  %v323 = vmax.f32 %v272, 0.0
  %v324 = vmax.f32 %v274, 0.0
  %v325 = vmax.f32 %v315, 0.0
  %v326 = vmax.f32 %v317, 0.0
  %v327 = vmax.f32 %v276, 0.0
  %v328 = vmax.f32 %v278, 0.0
  %v329 = vmax.f32 %v319, 0.0
  %v330 = vmax.f32 %v321, 0.0
  %v331 = vpack.c.bf16 %v327, %v323
  %v332 = vpack.c.bf16 %v328, %v324
  %v333 = vpack.c.bf16 %v329, %v325
  %v334 = vpack.c.bf16 %v330, %v326
  %v339 = vunpack.c.l.b16 %v331
  %v340 = vunpack.c.l.b16 %v332
  %v341 = vunpack.c.l.b16 %v333
  %v342 = vunpack.c.l.b16 %v334
  %v343 = vunpack.c.h.b16 %v331
  %v344 = vunpack.c.h.b16 %v332
  %v345 = vunpack.c.h.b16 %v333
  %v346 = vunpack.c.h.b16 %v334
  %v347 = vpack.c.b16 %v340, %v339
  %v348 = vpack.c.b16 %v342, %v341
  %v349 = vpack.c.b16 %v344, %v343
  %v350 = vpack.c.b16 %v346, %v345
  %355 = vst [vmem:[%s3] sm:$0xff] %v347
  %356 = vst [vmem:[%s3 + $0x8] sm:$0xff] %v348
  %357 = vst [vmem:[%s3 + $0x10] sm:$0xff] %v349
  %358 = vst [vmem:[%s3 + $0x18] sm:$0xff] %v350
  // Predicated region
  $region14: #{vae_forward.15} parent=0 // pred_check
    _
  $region15: #{vae_forward.15} parent=0 // pred_check_branch
    %360 = sbr.rel (0) target = $region17
  $region16: #{vae_forward.15} parent=0 // pred_region
    _
  $region17: #{vae_forward.15} parent=0 // pred_fallthru
    _
  // Predicated region
  $region18: #{vae_forward.15} parent=0 // pred_check
    _
  $region19: #{vae_forward.15} parent=0 // pred_check_branch
    %362 = sbr.rel (0) target = $region21
  $region20: #{vae_forward.15} parent=0 // pred_region
    _
  $region21: #{vae_forward.15} parent=0 // pred_fallthru
    _

// kernel: vae_forward.14
$region0: #{vae_forward.14}
  #allocation0 [shape = 'u32[]', space=smem, size = 0x4, offset = 0x4, fixed_abs, tag = 'smem constant byte address 0x4 - core index']
  #allocation1 [shape = 'u32[144,128]{1,0:T(1,128)}', space=vmem, size = 0x12000, scoped, tag = 'internal scratch']
  %s0 = inlined_call_operand.vmem [shape: bf16[16,512], index: 0, kind: input, shape index: {}]
  %s1 = inlined_call_operand.vmem [shape: bf16[512,256], index: 1, kind: input, shape index: {}]
  %s2 = inlined_call_operand.vmem [shape: f32[1,256], index: 2, kind: input, shape index: {}]
  %s3 = inlined_call_operand.vmem [shape: f32[16,128], index: 3, kind: input, shape index: {}]
  %s4 = inlined_call_operand.vmem [shape: bf16[16,128], index: 4, kind: output, shape index: {}]
  %s5 = sld [smem:[#allocation0]]
  $region26: #{vae_forward.14} parent=0
    _
  %s7 = ssub.s32 1, %s5
  %s8 = scalar_select 0, %s7, %s5
  // Predicated region
  $region2: #{vae_forward.14} parent=0 // pred_check
    _
  $region3: #{vae_forward.14} parent=0 // pred_check_branch
    %10 = sbr.rel (0) target = $region5
  $region4: #{vae_forward.14} parent=0 // pred_region
    _
  $region5: #{vae_forward.14} parent=0 // pred_fallthru
    _
  // Predicated region
  $region6: #{vae_forward.14} parent=0 // pred_check
    _
  $region7: #{vae_forward.14} parent=0 // pred_check_branch
    %12 = sbr.rel (0) target = $region9
  $region8: #{vae_forward.14} parent=0 // pred_region
    _
  $region9: #{vae_forward.14} parent=0 // pred_fallthru
    _
  // Predicated region
  $region10: #{vae_forward.14} parent=0 // pred_check
    _
  $region11: #{vae_forward.14} parent=0 // pred_check_branch
    %14 = sbr.rel (0) target = $region13
  $region12: #{vae_forward.14} parent=0 // pred_region
    _
  $region13: #{vae_forward.14} parent=0 // pred_fallthru
    _
  // Predicated region
  $region14: #{vae_forward.14} parent=0 // pred_check
    _
  $region15: #{vae_forward.14} parent=0 // pred_check_branch
    %16 = sbr.rel (0) target = $region17
  $region16: #{vae_forward.14} parent=0 // pred_region
    _
  $region17: #{vae_forward.14} parent=0 // pred_fallthru
    _
  %v17 = vld [vmem:[%s0] sm:$0xff]
  %v18 = vld [vmem:[%s0 + $0x8] sm:$0xff]
  %v19 = vld [vmem:[%s0 + $0x10] sm:$0xff]
  %v20 = vld [vmem:[%s0 + $0x18] sm:$0xff]
  %v21 = vld [vmem:[%s1] sm:$0xff]
  %v22 = vld [vmem:[%s1 + $0x8] sm:$0xff]
  %v23 = vld [vmem:[%s1 + $0x10] sm:$0xff]
  %v24 = vld [vmem:[%s1 + $0x18] sm:$0xff]
  %v25 = vld [vmem:[%s1 + $0x20] sm:$0xff]
  %v26 = vld [vmem:[%s1 + $0x28] sm:$0xff]
  %v27 = vld [vmem:[%s1 + $0x30] sm:$0xff]
  %v28 = vld [vmem:[%s1 + $0x38] sm:$0xff]
  %v29 = vld [vmem:[%s1 + $0x40] sm:$0xff]
  %v30 = vld [vmem:[%s1 + $0x48] sm:$0xff]
  %v31 = vld [vmem:[%s1 + $0x50] sm:$0xff]
  %v32 = vld [vmem:[%s1 + $0x58] sm:$0xff]
  %v33 = vld [vmem:[%s1 + $0x60] sm:$0xff]
  %v34 = vld [vmem:[%s1 + $0x68] sm:$0xff]
  %v35 = vld [vmem:[%s1 + $0x70] sm:$0xff]
  %v36 = vld [vmem:[%s1 + $0x78] sm:$0xff]
  %v37 = vld [vmem:[%s1 + $0x80] sm:$0xff]
  %v38 = vld [vmem:[%s1 + $0x88] sm:$0xff]
  %v39 = vld [vmem:[%s1 + $0x90] sm:$0xff]
  %v40 = vld [vmem:[%s1 + $0x98] sm:$0xff]
  %v41 = vld [vmem:[%s1 + $0xa0] sm:$0xff]
  %v42 = vld [vmem:[%s1 + $0xa8] sm:$0xff]
  %v43 = vld [vmem:[%s1 + $0xb0] sm:$0xff]
  %v44 = vld [vmem:[%s1 + $0xb8] sm:$0xff]
  %v45 = vld [vmem:[%s1 + $0xc0] sm:$0xff]
  %v46 = vld [vmem:[%s1 + $0xc8] sm:$0xff]
  %v47 = vld [vmem:[%s1 + $0xd0] sm:$0xff]
  %v48 = vld [vmem:[%s1 + $0xd8] sm:$0xff]
  %v49 = vld [vmem:[%s1 + $0xe0] sm:$0xff]
  %v50 = vld [vmem:[%s1 + $0xe8] sm:$0xff]
  %v51 = vld [vmem:[%s1 + $0xf0] sm:$0xff]
  %v52 = vld [vmem:[%s1 + $0xf8] sm:$0xff]
  %v53 = vld [vmem:[%s1 + $0x100] sm:$0xff]
  %v54 = vld [vmem:[%s1 + $0x108] sm:$0xff]
  %v55 = vld [vmem:[%s1 + $0x110] sm:$0xff]
  %v56 = vld [vmem:[%s1 + $0x118] sm:$0xff]
  %v57 = vld [vmem:[%s1 + $0x120] sm:$0xff]
  %v58 = vld [vmem:[%s1 + $0x128] sm:$0xff]
  %v59 = vld [vmem:[%s1 + $0x130] sm:$0xff]
  %v60 = vld [vmem:[%s1 + $0x138] sm:$0xff]
  %v61 = vld [vmem:[%s1 + $0x140] sm:$0xff]
  %v62 = vld [vmem:[%s1 + $0x148] sm:$0xff]
  %v63 = vld [vmem:[%s1 + $0x150] sm:$0xff]
  %v64 = vld [vmem:[%s1 + $0x158] sm:$0xff]
  %v65 = vld [vmem:[%s1 + $0x160] sm:$0xff]
  %v66 = vld [vmem:[%s1 + $0x168] sm:$0xff]
  %v67 = vld [vmem:[%s1 + $0x170] sm:$0xff]
  %v68 = vld [vmem:[%s1 + $0x178] sm:$0xff]
  %v69 = vld [vmem:[%s1 + $0x180] sm:$0xff]
  %v70 = vld [vmem:[%s1 + $0x188] sm:$0xff]
  %v71 = vld [vmem:[%s1 + $0x190] sm:$0xff]
  %v72 = vld [vmem:[%s1 + $0x198] sm:$0xff]
  %v73 = vld [vmem:[%s1 + $0x1a0] sm:$0xff]
  %v74 = vld [vmem:[%s1 + $0x1a8] sm:$0xff]
  %v75 = vld [vmem:[%s1 + $0x1b0] sm:$0xff]
  %v76 = vld [vmem:[%s1 + $0x1b8] sm:$0xff]
  %v77 = vld [vmem:[%s1 + $0x1c0] sm:$0xff]
  %v78 = vld [vmem:[%s1 + $0x1c8] sm:$0xff]
  %v79 = vld [vmem:[%s1 + $0x1d0] sm:$0xff]
  %v80 = vld [vmem:[%s1 + $0x1d8] sm:$0xff]
  %v81 = vld [vmem:[%s1 + $0x1e0] sm:$0xff]
  %v82 = vld [vmem:[%s1 + $0x1e8] sm:$0xff]
  %v83 = vld [vmem:[%s1 + $0x1f0] sm:$0xff]
  %v84 = vld [vmem:[%s1 + $0x1f8] sm:$0xff]
  %v85 = vld [vmem:[%s2] sm:$0x3]
  %v87 = vlaneseq
  %v88 = vshrl.u32 %v87, 7
  %v89 = vsub.s32 0, %v88
  %v90 = vrot.slane %v85, %v89
  %v91 = vlaneseq
  %v92 = vshrl.u32 %v91, 7
  %v93 = vsub.s32 1, %v92
  %v94 = vrot.slane %v85, %v93
  %v101 = vunpack.c.l.b16 %v17
  %v102 = vunpack.c.h.b16 %v17
  %v103 = vunpack.c.l.b16 %v18
  %v104 = vunpack.c.h.b16 %v18
  %v105 = vunpack.c.l.b16 %v19
  %v106 = vunpack.c.h.b16 %v19
  %v107 = vunpack.c.l.b16 %v20
  %v108 = vunpack.c.h.b16 %v20
  %v109 = vpack.c.b16 %v105, %v101
  %v110 = vpack.c.b16 %v106, %v102
  %v111 = vpack.c.b16 %v107, %v103
  %v112 = vpack.c.b16 %v108, %v104
  %v181 = vunpack.c.l.b16 %v21
  %v182 = vunpack.c.h.b16 %v21
  %v183 = vunpack.c.l.b16 %v22
  %v184 = vunpack.c.h.b16 %v22
  %v185 = vunpack.c.l.b16 %v23
  %v186 = vunpack.c.h.b16 %v23
  %v187 = vunpack.c.l.b16 %v24
  %v188 = vunpack.c.h.b16 %v24
  %v189 = vunpack.c.l.b16 %v25
  %v190 = vunpack.c.h.b16 %v25
  %v191 = vunpack.c.l.b16 %v26
  %v192 = vunpack.c.h.b16 %v26
  %v193 = vunpack.c.l.b16 %v27
  %v194 = vunpack.c.h.b16 %v27
  %v195 = vunpack.c.l.b16 %v28
  %v196 = vunpack.c.h.b16 %v28
  %v197 = vunpack.c.l.b16 %v29
  %v198 = vunpack.c.h.b16 %v29
  %v199 = vunpack.c.l.b16 %v30
  %v200 = vunpack.c.h.b16 %v30
  %v201 = vunpack.c.l.b16 %v31
  %v202 = vunpack.c.h.b16 %v31
  %v203 = vunpack.c.l.b16 %v32
  %v204 = vunpack.c.h.b16 %v32
  %v205 = vunpack.c.l.b16 %v33
  %v206 = vunpack.c.h.b16 %v33
  %v207 = vunpack.c.l.b16 %v34
  %v208 = vunpack.c.h.b16 %v34
  %v209 = vunpack.c.l.b16 %v35
  %v210 = vunpack.c.h.b16 %v35
  %v211 = vunpack.c.l.b16 %v36
  %v212 = vunpack.c.h.b16 %v36
  %v213 = vunpack.c.l.b16 %v37
  %v214 = vunpack.c.h.b16 %v37
  %v215 = vunpack.c.l.b16 %v38
  %v216 = vunpack.c.h.b16 %v38
  %v217 = vunpack.c.l.b16 %v39
  %v218 = vunpack.c.h.b16 %v39
  %v219 = vunpack.c.l.b16 %v40
  %v220 = vunpack.c.h.b16 %v40
  %v221 = vunpack.c.l.b16 %v41
  %v222 = vunpack.c.h.b16 %v41
  %v223 = vunpack.c.l.b16 %v42
  %v224 = vunpack.c.h.b16 %v42
  %v225 = vunpack.c.l.b16 %v43
  %v226 = vunpack.c.h.b16 %v43
  %v227 = vunpack.c.l.b16 %v44
  %v228 = vunpack.c.h.b16 %v44
  %v229 = vunpack.c.l.b16 %v45
  %v230 = vunpack.c.h.b16 %v45
  %v231 = vunpack.c.l.b16 %v46
  %v232 = vunpack.c.h.b16 %v46
  %v233 = vunpack.c.l.b16 %v47
  %v234 = vunpack.c.h.b16 %v47
  %v235 = vunpack.c.l.b16 %v48
  %v236 = vunpack.c.h.b16 %v48
  %v237 = vunpack.c.l.b16 %v49
  %v238 = vunpack.c.h.b16 %v49
  %v239 = vunpack.c.l.b16 %v50
  %v240 = vunpack.c.h.b16 %v50
  %v241 = vunpack.c.l.b16 %v51
  %v242 = vunpack.c.h.b16 %v51
  %v243 = vunpack.c.l.b16 %v52
  %v244 = vunpack.c.h.b16 %v52
  %v245 = vunpack.c.l.b16 %v53
  %v246 = vunpack.c.h.b16 %v53
  %v247 = vunpack.c.l.b16 %v54
  %v248 = vunpack.c.h.b16 %v54
  %v249 = vunpack.c.l.b16 %v55
  %v250 = vunpack.c.h.b16 %v55
  %v251 = vunpack.c.l.b16 %v56
  %v252 = vunpack.c.h.b16 %v56
  %v253 = vunpack.c.l.b16 %v57
  %v254 = vunpack.c.h.b16 %v57
  %v255 = vunpack.c.l.b16 %v58
  %v256 = vunpack.c.h.b16 %v58
  %v257 = vunpack.c.l.b16 %v59
  %v258 = vunpack.c.h.b16 %v59
  %v259 = vunpack.c.l.b16 %v60
  %v260 = vunpack.c.h.b16 %v60
  %v261 = vunpack.c.l.b16 %v61
  %v262 = vunpack.c.h.b16 %v61
  %v263 = vunpack.c.l.b16 %v62
  %v264 = vunpack.c.h.b16 %v62
  %v265 = vunpack.c.l.b16 %v63
  %v266 = vunpack.c.h.b16 %v63
  %v267 = vunpack.c.l.b16 %v64
  %v268 = vunpack.c.h.b16 %v64
  %v269 = vunpack.c.l.b16 %v65
  %v270 = vunpack.c.h.b16 %v65
  %v271 = vunpack.c.l.b16 %v66
  %v272 = vunpack.c.h.b16 %v66
  %v273 = vunpack.c.l.b16 %v67
  %v274 = vunpack.c.h.b16 %v67
  %v275 = vunpack.c.l.b16 %v68
  %v276 = vunpack.c.h.b16 %v68
  %v277 = vunpack.c.l.b16 %v69
  %v278 = vunpack.c.h.b16 %v69
  %v279 = vunpack.c.l.b16 %v70
  %v280 = vunpack.c.h.b16 %v70
  %v281 = vunpack.c.l.b16 %v71
  %v282 = vunpack.c.h.b16 %v71
  %v283 = vunpack.c.l.b16 %v72
  %v284 = vunpack.c.h.b16 %v72
  %v285 = vunpack.c.l.b16 %v73
  %v286 = vunpack.c.h.b16 %v73
  %v287 = vunpack.c.l.b16 %v74
  %v288 = vunpack.c.h.b16 %v74
  %v289 = vunpack.c.l.b16 %v75
  %v290 = vunpack.c.h.b16 %v75
  %v291 = vunpack.c.l.b16 %v76
  %v292 = vunpack.c.h.b16 %v76
  %v293 = vunpack.c.l.b16 %v77
  %v294 = vunpack.c.h.b16 %v77
  %v295 = vunpack.c.l.b16 %v78
  %v296 = vunpack.c.h.b16 %v78
  %v297 = vunpack.c.l.b16 %v79
  %v298 = vunpack.c.h.b16 %v79
  %v299 = vunpack.c.l.b16 %v80
  %v300 = vunpack.c.h.b16 %v80
  %v301 = vunpack.c.l.b16 %v81
  %v302 = vunpack.c.h.b16 %v81
  %v303 = vunpack.c.l.b16 %v82
  %v304 = vunpack.c.h.b16 %v82
  %v305 = vunpack.c.l.b16 %v83
  %v306 = vunpack.c.h.b16 %v83
  %v307 = vunpack.c.l.b16 %v84
  %v308 = vunpack.c.h.b16 %v84
  %v309 = vpack.c.b16 %v183, %v181
  %v310 = vpack.c.b16 %v184, %v182
  %v311 = vpack.c.b16 %v187, %v185
  %v312 = vpack.c.b16 %v188, %v186
  %v313 = vpack.c.b16 %v191, %v189
  %v314 = vpack.c.b16 %v192, %v190
  %v315 = vpack.c.b16 %v195, %v193
  %v316 = vpack.c.b16 %v196, %v194
  %v317 = vpack.c.b16 %v199, %v197
  %v318 = vpack.c.b16 %v200, %v198
  %v319 = vpack.c.b16 %v203, %v201
  %v320 = vpack.c.b16 %v204, %v202
  %v321 = vpack.c.b16 %v207, %v205
  %v322 = vpack.c.b16 %v208, %v206
  %v323 = vpack.c.b16 %v211, %v209
  %v324 = vpack.c.b16 %v212, %v210
  %v325 = vpack.c.b16 %v215, %v213
  %v326 = vpack.c.b16 %v216, %v214
  %v327 = vpack.c.b16 %v219, %v217
  %v328 = vpack.c.b16 %v220, %v218
  %v329 = vpack.c.b16 %v223, %v221
  %v330 = vpack.c.b16 %v224, %v222
  %v331 = vpack.c.b16 %v227, %v225
  %v332 = vpack.c.b16 %v228, %v226
  %v333 = vpack.c.b16 %v231, %v229
  %v334 = vpack.c.b16 %v232, %v230
  %v335 = vpack.c.b16 %v235, %v233
  %v336 = vpack.c.b16 %v236, %v234
  %v337 = vpack.c.b16 %v239, %v237
  %v338 = vpack.c.b16 %v240, %v238
  %v339 = vpack.c.b16 %v243, %v241
  %v340 = vpack.c.b16 %v244, %v242
  %v341 = vpack.c.b16 %v247, %v245
  %v342 = vpack.c.b16 %v248, %v246
  %v343 = vpack.c.b16 %v251, %v249
  %v344 = vpack.c.b16 %v252, %v250
  %v345 = vpack.c.b16 %v255, %v253
  %v346 = vpack.c.b16 %v256, %v254
  %v347 = vpack.c.b16 %v259, %v257
  %v348 = vpack.c.b16 %v260, %v258
  %v349 = vpack.c.b16 %v263, %v261
  %v350 = vpack.c.b16 %v264, %v262
  %v351 = vpack.c.b16 %v267, %v265
  %v352 = vpack.c.b16 %v268, %v266
  %v353 = vpack.c.b16 %v271, %v269
  %v354 = vpack.c.b16 %v272, %v270
  %v355 = vpack.c.b16 %v275, %v273
  %v356 = vpack.c.b16 %v276, %v274
  %v357 = vpack.c.b16 %v279, %v277
  %v358 = vpack.c.b16 %v280, %v278
  %v359 = vpack.c.b16 %v283, %v281
  %v360 = vpack.c.b16 %v284, %v282
  %v361 = vpack.c.b16 %v287, %v285
  %v362 = vpack.c.b16 %v288, %v286
  %v363 = vpack.c.b16 %v291, %v289
  %v364 = vpack.c.b16 %v292, %v290
  %v365 = vpack.c.b16 %v295, %v293
  %v366 = vpack.c.b16 %v296, %v294
  %v367 = vpack.c.b16 %v299, %v297
  %v368 = vpack.c.b16 %v300, %v298
  %v369 = vpack.c.b16 %v303, %v301
  %v370 = vpack.c.b16 %v304, %v302
  %v371 = vpack.c.b16 %v307, %v305
  %v372 = vpack.c.b16 %v308, %v306
  %437 = vmatprep.subr.bf16.mxu0 %v310
  %438 = vmatpush1.bf16.msra.mxu0 %v309
  %439 = vmatprep.subr.bf16.mxu0 %v312
  %440 = vmatpush1.bf16.msra.mxu0 %v311
  %441 = vmatprep.subr.bf16.mxu0 %v314
  %442 = vmatpush1.bf16.msra.mxu0 %v313
  %443 = vmatprep.subr.bf16.mxu0 %v316
  %444 = vmatpush1.bf16.msra.mxu0 %v315
  %445 = vmatprep.subr.bf16.mxu0 %v318
  %446 = vmatpush1.bf16.msra.mxu0 %v317
  %447 = vmatprep.subr.bf16.mxu0 %v320
  %448 = vmatpush1.bf16.msra.mxu0 %v319
  %449 = vmatprep.subr.bf16.mxu0 %v322
  %450 = vmatpush1.bf16.msra.mxu0 %v321
  %451 = vmatprep.subr.bf16.mxu0 %v324
  %452 = vmatpush1.bf16.msra.mxu0 %v323
  %453 = vmatprep.subr.bf16.mxu0 %v326
  %454 = vmatpush1.bf16.msra.mxu0 %v325
  %455 = vmatprep.subr.bf16.mxu0 %v328
  %456 = vmatpush1.bf16.msra.mxu0 %v327
  %457 = vmatprep.subr.bf16.mxu0 %v330
  %458 = vmatpush1.bf16.msra.mxu0 %v329
  %459 = vmatprep.subr.bf16.mxu0 %v332
  %460 = vmatpush1.bf16.msra.mxu0 %v331
  %461 = vmatprep.subr.bf16.mxu0 %v334
  %462 = vmatpush1.bf16.msra.mxu0 %v333
  %463 = vmatprep.subr.bf16.mxu0 %v336
  %464 = vmatpush1.bf16.msra.mxu0 %v335
  %465 = vmatprep.subr.bf16.mxu0 %v338
  %466 = vmatpush1.bf16.msra.mxu0 %v337
  %467 = vmatprep.subr.bf16.mxu0 %v340
  %468 = vmatpush1.bf16.msra.mxu0 %v339
  %469 = vmatprep.mubr.bf16.mxu0 %v110
  %470 = vmatmul.mubr.bf16.gmra.mrb[0].mxu0 %v109
  %v471 = vpop.f32.mrb[0].mxu0
  %v472 = vadd.f32 %v90, %v471
  %v473 = vpop.f32.mrb[0].mxu0
  %v474 = vadd.f32 %v94, %v473
  %v475 = vpop.f32.mrb[0].mxu0
  %v476 = vadd.f32 %v90, %v475
  %v477 = vpop.f32.mrb[0].mxu0
  %v478 = vadd.f32 %v94, %v477
  %479 = vdwg.mxu0
  %480 = vmatprep.subr.bf16.mxu0 %v342
  %481 = vmatpush1.bf16.msra.mxu0 %v341
  %482 = vmatprep.subr.bf16.mxu0 %v344
  %483 = vmatpush1.bf16.msra.mxu0 %v343
  %484 = vmatprep.subr.bf16.mxu0 %v346
  %485 = vmatpush1.bf16.msra.mxu0 %v345
  %486 = vmatprep.subr.bf16.mxu0 %v348
  %487 = vmatpush1.bf16.msra.mxu0 %v347
  %488 = vmatprep.subr.bf16.mxu0 %v350
  %489 = vmatpush1.bf16.msra.mxu0 %v349
  %490 = vmatprep.subr.bf16.mxu0 %v352
  %491 = vmatpush1.bf16.msra.mxu0 %v351
  %492 = vmatprep.subr.bf16.mxu0 %v354
  %493 = vmatpush1.bf16.msra.mxu0 %v353
  %494 = vmatprep.subr.bf16.mxu0 %v356
  %495 = vmatpush1.bf16.msra.mxu0 %v355
  %496 = vmatprep.subr.bf16.mxu0 %v358
  %497 = vmatpush1.bf16.msra.mxu0 %v357
  %498 = vmatprep.subr.bf16.mxu0 %v360
  %499 = vmatpush1.bf16.msra.mxu0 %v359
  %500 = vmatprep.subr.bf16.mxu0 %v362
  %501 = vmatpush1.bf16.msra.mxu0 %v361
  %502 = vmatprep.subr.bf16.mxu0 %v364
  %503 = vmatpush1.bf16.msra.mxu0 %v363
  %504 = vmatprep.subr.bf16.mxu0 %v366
  %505 = vmatpush1.bf16.msra.mxu0 %v365
  %506 = vmatprep.subr.bf16.mxu0 %v368
  %507 = vmatpush1.bf16.msra.mxu0 %v367
  %508 = vmatprep.subr.bf16.mxu0 %v370
  %509 = vmatpush1.bf16.msra.mxu0 %v369
  %510 = vmatprep.subr.bf16.mxu0 %v372
  %511 = vmatpush1.bf16.msra.mxu0 %v371
  %512 = vmatprep.mubr.bf16.mxu0 %v112
  %513 = vmatmul.mubr.bf16.gmra.mrb[0].mxu0 %v111
  %v514 = vpop.f32.mrb[0].mxu0
  %v515 = vadd.f32 %v472, %v514
  %v516 = vpop.f32.mrb[0].mxu0
  %v517 = vadd.f32 %v474, %v516
  %v518 = vpop.f32.mrb[0].mxu0
  %v519 = vadd.f32 %v476, %v518
  %v520 = vpop.f32.mrb[0].mxu0
  %v521 = vadd.f32 %v478, %v520
  %522 = vdwg.mxu0
  %v523 = vmul.f32 %v517, 0.5
  %v524 = vmul.f32 %v521, 0.5
  %v525 = vmul.f32 %v523, 1.442695
  %v526 = vpow.pop %v525
  %v527 = vmul.f32 %v524, 1.442695
  %v528 = vpow.pop %v527
  %v529 = vld [vmem:[%s3] sm:$0xff]
  %v530 = vld [vmem:[%s3 + $0x8] sm:$0xff]
  %v531 = vmul.f32 %v526, %v529
  %v532 = vmul.f32 %v528, %v530
  %v533 = vadd.f32 %v515, %v531
  %v534 = vadd.f32 %v519, %v532
  %v535 = vpack.c.bf16 %v534, %v533
  %v537 = vunpack.c.l.b16 %v535
  %v538 = vunpack.c.h.b16 %v535
  %v539 = vpack.c.b16 %v537, %v537
  %v540 = vpack.c.b16 %v538, %v538
  %543 = vst [vmem:[%s4] sm:$0xf] %v539
  %544 = vst [vmem:[%s4 + $0x4] sm:$0xf] %v540
  // Predicated region
  $region18: #{vae_forward.14} parent=0 // pred_check
    _
  $region19: #{vae_forward.14} parent=0 // pred_check_branch
    %546 = sbr.rel (0) target = $region21
  $region20: #{vae_forward.14} parent=0 // pred_region
    _
  $region21: #{vae_forward.14} parent=0 // pred_fallthru
    _
  // Predicated region
  $region22: #{vae_forward.14} parent=0 // pred_check
    _
  $region23: #{vae_forward.14} parent=0 // pred_check_branch
    %548 = sbr.rel (0) target = $region25
  $region24: #{vae_forward.14} parent=0 // pred_region
    _
  $region25: #{vae_forward.14} parent=0 // pred_fallthru
    _

// kernel: vae_forward.16
$region0: #{vae_forward.16}
  #allocation0 [shape = 'u32[]', space=smem, size = 0x4, offset = 0x4, fixed_abs, tag = 'smem constant byte address 0x4 - core index']
  #allocation1 [shape = 'u32[144,128]{1,0:T(1,128)}', space=vmem, size = 0x12000, scoped, tag = 'internal scratch']
  %s0 = inlined_call_operand.vmem [shape: bf16[32,128], index: 0, kind: input, shape index: {}]
  %s1 = inlined_call_operand.vmem [shape: bf16[128,128], index: 1, kind: input, shape index: {}]
  %s2 = inlined_call_operand.vmem [shape: f32[1,128], index: 2, kind: input, shape index: {}]
  %s3 = inlined_call_operand.vmem [shape: bf16[32,128], index: 3, kind: output, shape index: {}]
  %s4 = sld [smem:[#allocation0]]
  $region22: #{vae_forward.16} parent=0
    _
  %s6 = ssub.s32 1, %s4
  %s7 = scalar_select 0, %s6, %s4
  // Predicated region
  $region2: #{vae_forward.16} parent=0 // pred_check
    _
  $region3: #{vae_forward.16} parent=0 // pred_check_branch
    %9 = sbr.rel (0) target = $region5
  $region4: #{vae_forward.16} parent=0 // pred_region
    _
  $region5: #{vae_forward.16} parent=0 // pred_fallthru
    _
  // Predicated region
  $region6: #{vae_forward.16} parent=0 // pred_check
    _
  $region7: #{vae_forward.16} parent=0 // pred_check_branch
    %11 = sbr.rel (0) target = $region9
  $region8: #{vae_forward.16} parent=0 // pred_region
    _
  $region9: #{vae_forward.16} parent=0 // pred_fallthru
    _
  // Predicated region
  $region10: #{vae_forward.16} parent=0 // pred_check
    _
  $region11: #{vae_forward.16} parent=0 // pred_check_branch
    %13 = sbr.rel (0) target = $region13
  $region12: #{vae_forward.16} parent=0 // pred_region
    _
  $region13: #{vae_forward.16} parent=0 // pred_fallthru
    _
  %v15 = vld [vmem:[%s0] sm:$0xf]
  %v16 = vld [vmem:[%s0 + $0x4] sm:$0xf]
  %v17 = vld [vmem:[%s0 + $0x8] sm:$0xf]
  %v18 = vld [vmem:[%s0 + $0xc] sm:$0xf]
  %v19 = vld [vmem:[%s1] sm:$0xf]
  %v20 = vld [vmem:[%s1 + $0x4] sm:$0xf]
  %v21 = vld [vmem:[%s1 + $0x8] sm:$0xf]
  %v22 = vld [vmem:[%s1 + $0xc] sm:$0xf]
  %v23 = vld [vmem:[%s1 + $0x10] sm:$0xf]
  %v24 = vld [vmem:[%s1 + $0x14] sm:$0xf]
  %v25 = vld [vmem:[%s1 + $0x18] sm:$0xf]
  %v26 = vld [vmem:[%s1 + $0x1c] sm:$0xf]
  %v27 = vld [vmem:[%s1 + $0x20] sm:$0xf]
  %v28 = vld [vmem:[%s1 + $0x24] sm:$0xf]
  %v29 = vld [vmem:[%s1 + $0x28] sm:$0xf]
  %v30 = vld [vmem:[%s1 + $0x2c] sm:$0xf]
  %v31 = vld [vmem:[%s1 + $0x30] sm:$0xf]
  %v32 = vld [vmem:[%s1 + $0x34] sm:$0xf]
  %v33 = vld [vmem:[%s1 + $0x38] sm:$0xf]
  %v34 = vld [vmem:[%s1 + $0x3c] sm:$0xf]
  %v35 = vld [vmem:[%s2] sm:$0x1]
  %v37 = vlaneseq
  %v38 = vshrl.u32 %v37, 7
  %v39 = vsub.s32 0, %v38
  %v40 = vrot.slane %v35, %v39
  %v46 = vunpack.c.l.b16 %v15
  %v47 = vunpack.c.l.b16 %v16
  %v48 = vunpack.c.l.b16 %v17
  %v49 = vunpack.c.l.b16 %v18
  %v50 = vpack.c.b16 %v47, %v46
  %v51 = vpack.c.b16 %v49, %v48
  %v70 = vunpack.c.l.b16 %v19
  %v71 = vunpack.c.l.b16 %v20
  %v72 = vunpack.c.l.b16 %v21
  %v73 = vunpack.c.l.b16 %v22
  %v74 = vunpack.c.l.b16 %v23
  %v75 = vunpack.c.l.b16 %v24
  %v76 = vunpack.c.l.b16 %v25
  %v77 = vunpack.c.l.b16 %v26
  %v78 = vunpack.c.l.b16 %v27
  %v79 = vunpack.c.l.b16 %v28
  %v80 = vunpack.c.l.b16 %v29
  %v81 = vunpack.c.l.b16 %v30
  %v82 = vunpack.c.l.b16 %v31
  %v83 = vunpack.c.l.b16 %v32
  %v84 = vunpack.c.l.b16 %v33
  %v85 = vunpack.c.l.b16 %v34
  %v86 = vpack.c.b16 %v71, %v70
  %v87 = vpack.c.b16 %v73, %v72
  %v88 = vpack.c.b16 %v75, %v74
  %v89 = vpack.c.b16 %v77, %v76
  %v90 = vpack.c.b16 %v79, %v78
  %v91 = vpack.c.b16 %v81, %v80
  %v92 = vpack.c.b16 %v83, %v82
  %v93 = vpack.c.b16 %v85, %v84
  %102 = vmatprep.subr.bf16.mxu0 0
  %103 = vmatpush1.bf16.msra.mxu0 %v86
  %104 = vmatprep.subr.bf16.mxu0 0
  %105 = vmatpush1.bf16.msra.mxu0 %v87
  %106 = vmatprep.subr.bf16.mxu0 0
  %107 = vmatpush1.bf16.msra.mxu0 %v88
  %108 = vmatprep.subr.bf16.mxu0 0
  %109 = vmatpush1.bf16.msra.mxu0 %v89
  %110 = vmatprep.subr.bf16.mxu0 0
  %111 = vmatpush1.bf16.msra.mxu0 %v90
  %112 = vmatprep.subr.bf16.mxu0 0
  %113 = vmatpush1.bf16.msra.mxu0 %v91
  %114 = vmatprep.subr.bf16.mxu0 0
  %115 = vmatpush1.bf16.msra.mxu0 %v92
  %116 = vmatprep.subr.bf16.mxu0 0
  %117 = vmatpush1.bf16.msra.mxu0 %v93
  %118 = vmatprep.subr.bf16.mxu0 0
  %119 = vmatpush1.bf16.msra.mxu0 0
  %120 = vmatprep.subr.bf16.mxu0 0
  %121 = vmatpush1.bf16.msra.mxu0 0
  %122 = vmatprep.subr.bf16.mxu0 0
  %123 = vmatpush1.bf16.msra.mxu0 0
  %124 = vmatprep.subr.bf16.mxu0 0
  %125 = vmatpush1.bf16.msra.mxu0 0
  %126 = vmatprep.subr.bf16.mxu0 0
  %127 = vmatpush1.bf16.msra.mxu0 0
  %128 = vmatprep.subr.bf16.mxu0 0
  %129 = vmatpush1.bf16.msra.mxu0 0
  %130 = vmatprep.subr.bf16.mxu0 0
  %131 = vmatpush1.bf16.msra.mxu0 0
  %132 = vmatprep.subr.bf16.mxu0 0
  %133 = vmatpush1.bf16.msra.mxu0 0
  %134 = vmatprep.mubr.bf16.mxu0 0
  %135 = vmatmul.mubr.bf16.gmra.mrb[0].mxu0 %v50
  %v136 = vpop.f32.mrb[0].mxu0
  %v137 = vadd.f32 %v40, %v136
  %v138 = vpop.f32.mrb[0].mxu0
  %v139 = vpop.f32.mrb[0].mxu0
  %v140 = vadd.f32 %v40, %v139
  %v141 = vpop.f32.mrb[0].mxu0
  %142 = vmatprep.mubr.bf16.mxu0 0
  %143 = vmatmul.mubr.bf16.gmra.mrb[0].mxu0 %v51
  %v144 = vpop.f32.mrb[0].mxu0
  %v145 = vadd.f32 %v40, %v144
  %v146 = vpop.f32.mrb[0].mxu0
  %v147 = vpop.f32.mrb[0].mxu0
  %v148 = vadd.f32 %v40, %v147
  %v149 = vpop.f32.mrb[0].mxu0
  %150 = vdwg.mxu0
  %v151 = vmax.f32 %v137, 0.0
  %v152 = vmax.f32 %v140, 0.0
  %v153 = vmax.f32 %v145, 0.0
  %v154 = vmax.f32 %v148, 0.0
  %v155 = vpack.c.bf16 %v152, %v151
  %v156 = vpack.c.bf16 %v154, %v153
  %v159 = vunpack.c.l.b16 %v155
  %v160 = vunpack.c.h.b16 %v155
  %v161 = vunpack.c.l.b16 %v156
  %v162 = vunpack.c.h.b16 %v156
  %v163 = vpack.c.b16 %v159, %v159
  %v164 = vpack.c.b16 %v160, %v160
  %v165 = vpack.c.b16 %v161, %v161
  %v166 = vpack.c.b16 %v162, %v162
  %171 = vst [vmem:[%s3] sm:$0xf] %v163
  %172 = vst [vmem:[%s3 + $0x4] sm:$0xf] %v164
  %173 = vst [vmem:[%s3 + $0x8] sm:$0xf] %v165
  %174 = vst [vmem:[%s3 + $0xc] sm:$0xf] %v166
  // Predicated region
  $region14: #{vae_forward.16} parent=0 // pred_check
    _
  $region15: #{vae_forward.16} parent=0 // pred_check_branch
    %176 = sbr.rel (0) target = $region17
  $region16: #{vae_forward.16} parent=0 // pred_region
    _
  $region17: #{vae_forward.16} parent=0 // pred_fallthru
    _
  // Predicated region
  $region18: #{vae_forward.16} parent=0 // pred_check
    _
  $region19: #{vae_forward.16} parent=0 // pred_check_branch
    %178 = sbr.rel (0) target = $region21
  $region20: #{vae_forward.16} parent=0 // pred_region
    _
  $region21: #{vae_forward.16} parent=0 // pred_fallthru
    _

// kernel: vae_forward.20
$region0: #{vae_forward.20}
  #allocation0 [shape = 'u32[]', space=smem, size = 0x4, offset = 0x4, fixed_abs, tag = 'smem constant byte address 0x4 - core index']
  #allocation1 [shape = 'u32[144,128]{1,0:T(1,128)}', space=vmem, size = 0x12000, scoped, tag = 'internal scratch']
  %s0 = inlined_call_operand.vmem [shape: bf16[128,128], index: 0, kind: input, shape index: {}]
  %s1 = inlined_call_operand.vmem [shape: bf16[128,128], index: 1, kind: input, shape index: {}]
  %s2 = inlined_call_operand.vmem [shape: f32[1,128], index: 2, kind: input, shape index: {}]
  %s3 = inlined_call_operand.vmem [shape: f32[128,128], index: 3, kind: output, shape index: {}]
  %s4 = sld [smem:[#allocation0]]
  $region22: #{vae_forward.20} parent=0
    _
  %s6 = ssub.s32 1, %s4
  %s7 = scalar_select 0, %s6, %s4
  // Predicated region
  $region2: #{vae_forward.20} parent=0 // pred_check
    _
  $region3: #{vae_forward.20} parent=0 // pred_check_branch
    %9 = sbr.rel (0) target = $region5
  $region4: #{vae_forward.20} parent=0 // pred_region
    _
  $region5: #{vae_forward.20} parent=0 // pred_fallthru
    _
  // Predicated region
  $region6: #{vae_forward.20} parent=0 // pred_check
    _
  $region7: #{vae_forward.20} parent=0 // pred_check_branch
    %11 = sbr.rel (0) target = $region9
  $region8: #{vae_forward.20} parent=0 // pred_region
    _
  $region9: #{vae_forward.20} parent=0 // pred_fallthru
    _
  // Predicated region
  $region10: #{vae_forward.20} parent=0 // pred_check
    _
  $region11: #{vae_forward.20} parent=0 // pred_check_branch
    %13 = sbr.rel (0) target = $region13
  $region12: #{vae_forward.20} parent=0 // pred_region
    _
  $region13: #{vae_forward.20} parent=0 // pred_fallthru
    _
  %v15 = vld [vmem:[%s0] sm:$0xf]
  %v16 = vld [vmem:[%s0 + $0x4] sm:$0xf]
  %v17 = vld [vmem:[%s0 + $0x8] sm:$0xf]
  %v18 = vld [vmem:[%s0 + $0xc] sm:$0xf]
  %v19 = vld [vmem:[%s0 + $0x10] sm:$0xf]
  %v20 = vld [vmem:[%s0 + $0x14] sm:$0xf]
  %v21 = vld [vmem:[%s0 + $0x18] sm:$0xf]
  %v22 = vld [vmem:[%s0 + $0x1c] sm:$0xf]
  %v23 = vld [vmem:[%s0 + $0x20] sm:$0xf]
  %v24 = vld [vmem:[%s0 + $0x24] sm:$0xf]
  %v25 = vld [vmem:[%s0 + $0x28] sm:$0xf]
  %v26 = vld [vmem:[%s0 + $0x2c] sm:$0xf]
  %v27 = vld [vmem:[%s0 + $0x30] sm:$0xf]
  %v28 = vld [vmem:[%s0 + $0x34] sm:$0xf]
  %v29 = vld [vmem:[%s0 + $0x38] sm:$0xf]
  %v30 = vld [vmem:[%s0 + $0x3c] sm:$0xf]
  %v31 = vld [vmem:[%s1] sm:$0xf]
  %v32 = vld [vmem:[%s1 + $0x4] sm:$0xf]
  %v33 = vld [vmem:[%s1 + $0x8] sm:$0xf]
  %v34 = vld [vmem:[%s1 + $0xc] sm:$0xf]
  %v35 = vld [vmem:[%s1 + $0x10] sm:$0xf]
  %v36 = vld [vmem:[%s1 + $0x14] sm:$0xf]
  %v37 = vld [vmem:[%s1 + $0x18] sm:$0xf]
  %v38 = vld [vmem:[%s1 + $0x1c] sm:$0xf]
  %v39 = vld [vmem:[%s1 + $0x20] sm:$0xf]
  %v40 = vld [vmem:[%s1 + $0x24] sm:$0xf]
  %v41 = vld [vmem:[%s1 + $0x28] sm:$0xf]
  %v42 = vld [vmem:[%s1 + $0x2c] sm:$0xf]
  %v43 = vld [vmem:[%s1 + $0x30] sm:$0xf]
  %v44 = vld [vmem:[%s1 + $0x34] sm:$0xf]
  %v45 = vld [vmem:[%s1 + $0x38] sm:$0xf]
  %v46 = vld [vmem:[%s1 + $0x3c] sm:$0xf]
  %v47 = vld [vmem:[%s2] sm:$0x1]
  %v49 = vlaneseq
  %v50 = vshrl.u32 %v49, 7
  %v51 = vsub.s32 0, %v50
  %v52 = vrot.slane %v47, %v51
  %v70 = vunpack.c.l.b16 %v15
  %v71 = vunpack.c.l.b16 %v16
  %v72 = vunpack.c.l.b16 %v17
  %v73 = vunpack.c.l.b16 %v18
  %v74 = vunpack.c.l.b16 %v19
  %v75 = vunpack.c.l.b16 %v20
  %v76 = vunpack.c.l.b16 %v21
  %v77 = vunpack.c.l.b16 %v22
  %v78 = vunpack.c.l.b16 %v23
  %v79 = vunpack.c.l.b16 %v24
  %v80 = vunpack.c.l.b16 %v25
  %v81 = vunpack.c.l.b16 %v26
  %v82 = vunpack.c.l.b16 %v27
  %v83 = vunpack.c.l.b16 %v28
  %v84 = vunpack.c.l.b16 %v29
  %v85 = vunpack.c.l.b16 %v30
  %v86 = vpack.c.b16 %v71, %v70
  %v87 = vpack.c.b16 %v73, %v72
  %v88 = vpack.c.b16 %v75, %v74
  %v89 = vpack.c.b16 %v77, %v76
  %v90 = vpack.c.b16 %v79, %v78
  %v91 = vpack.c.b16 %v81, %v80
  %v92 = vpack.c.b16 %v83, %v82
  %v93 = vpack.c.b16 %v85, %v84
  %v118 = vunpack.c.l.b16 %v31
  %v119 = vunpack.c.l.b16 %v32
  %v120 = vunpack.c.l.b16 %v33
  %v121 = vunpack.c.l.b16 %v34
  %v122 = vunpack.c.l.b16 %v35
  %v123 = vunpack.c.l.b16 %v36
  %v124 = vunpack.c.l.b16 %v37
  %v125 = vunpack.c.l.b16 %v38
  %v126 = vunpack.c.l.b16 %v39
  %v127 = vunpack.c.l.b16 %v40
  %v128 = vunpack.c.l.b16 %v41
  %v129 = vunpack.c.l.b16 %v42
  %v130 = vunpack.c.l.b16 %v43
  %v131 = vunpack.c.l.b16 %v44
  %v132 = vunpack.c.l.b16 %v45
  %v133 = vunpack.c.l.b16 %v46
  %v134 = vpack.c.b16 %v119, %v118
  %v135 = vpack.c.b16 %v121, %v120
  %v136 = vpack.c.b16 %v123, %v122
  %v137 = vpack.c.b16 %v125, %v124
  %v138 = vpack.c.b16 %v127, %v126
  %v139 = vpack.c.b16 %v129, %v128
  %v140 = vpack.c.b16 %v131, %v130
  %v141 = vpack.c.b16 %v133, %v132
  %150 = vmatprep.subr.bf16.mxu0 0
  %151 = vmatpush1.bf16.msra.mxu0 %v134
  %152 = vmatprep.subr.bf16.mxu0 0
  %153 = vmatpush1.bf16.msra.mxu0 %v135
  %154 = vmatprep.subr.bf16.mxu0 0
  %155 = vmatpush1.bf16.msra.mxu0 %v136
  %156 = vmatprep.subr.bf16.mxu0 0
  %157 = vmatpush1.bf16.msra.mxu0 %v137
  %158 = vmatprep.subr.bf16.mxu0 0
  %159 = vmatpush1.bf16.msra.mxu0 %v138
  %160 = vmatprep.subr.bf16.mxu0 0
  %161 = vmatpush1.bf16.msra.mxu0 %v139
  %162 = vmatprep.subr.bf16.mxu0 0
  %163 = vmatpush1.bf16.msra.mxu0 %v140
  %164 = vmatprep.subr.bf16.mxu0 0
  %165 = vmatpush1.bf16.msra.mxu0 %v141
  %166 = vmatprep.subr.bf16.mxu0 0
  %167 = vmatpush1.bf16.msra.mxu0 0
  %168 = vmatprep.subr.bf16.mxu0 0
  %169 = vmatpush1.bf16.msra.mxu0 0
  %170 = vmatprep.subr.bf16.mxu0 0
  %171 = vmatpush1.bf16.msra.mxu0 0
  %172 = vmatprep.subr.bf16.mxu0 0
  %173 = vmatpush1.bf16.msra.mxu0 0
  %174 = vmatprep.subr.bf16.mxu0 0
  %175 = vmatpush1.bf16.msra.mxu0 0
  %176 = vmatprep.subr.bf16.mxu0 0
  %177 = vmatpush1.bf16.msra.mxu0 0
  %178 = vmatprep.subr.bf16.mxu0 0
  %179 = vmatpush1.bf16.msra.mxu0 0
  %180 = vmatprep.subr.bf16.mxu0 0
  %181 = vmatpush1.bf16.msra.mxu0 0
  %182 = vmatprep.mubr.bf16.mxu0 0
  %183 = vmatmul.mubr.bf16.gmra.mrb[0].mxu0 %v86
  %v184 = vpop.f32.mrb[0].mxu0
  %v185 = vadd.f32 %v52, %v184
  %v186 = vpop.f32.mrb[0].mxu0
  %v187 = vpop.f32.mrb[0].mxu0
  %v188 = vadd.f32 %v52, %v187
  %v189 = vpop.f32.mrb[0].mxu0
  %190 = vmatprep.mubr.bf16.mxu0 0
  %191 = vmatmul.mubr.bf16.gmra.mrb[0].mxu0 %v87
  %v192 = vpop.f32.mrb[0].mxu0
  %v193 = vadd.f32 %v52, %v192
  %v194 = vpop.f32.mrb[0].mxu0
  %v195 = vpop.f32.mrb[0].mxu0
  %v196 = vadd.f32 %v52, %v195
  %v197 = vpop.f32.mrb[0].mxu0
  %198 = vmatprep.mubr.bf16.mxu0 0
  %199 = vmatmul.mubr.bf16.gmra.mrb[0].mxu0 %v88
  %v200 = vpop.f32.mrb[0].mxu0
  %v201 = vadd.f32 %v52, %v200
  %v202 = vpop.f32.mrb[0].mxu0
  %v203 = vpop.f32.mrb[0].mxu0
  %v204 = vadd.f32 %v52, %v203
  %v205 = vpop.f32.mrb[0].mxu0
  %206 = vmatprep.mubr.bf16.mxu0 0
  %207 = vmatmul.mubr.bf16.gmra.mrb[0].mxu0 %v89
  %v208 = vpop.f32.mrb[0].mxu0
  %v209 = vadd.f32 %v52, %v208
  %v210 = vpop.f32.mrb[0].mxu0
  %v211 = vpop.f32.mrb[0].mxu0
  %v212 = vadd.f32 %v52, %v211
  %v213 = vpop.f32.mrb[0].mxu0
  %214 = vmatprep.mubr.bf16.mxu0 0
  %215 = vmatmul.mubr.bf16.gmra.mrb[0].mxu0 %v90
  %v216 = vpop.f32.mrb[0].mxu0
  %v217 = vadd.f32 %v52, %v216
  %v218 = vpop.f32.mrb[0].mxu0
  %v219 = vpop.f32.mrb[0].mxu0
  %v220 = vadd.f32 %v52, %v219
  %v221 = vpop.f32.mrb[0].mxu0
  %222 = vmatprep.mubr.bf16.mxu0 0
  %223 = vmatmul.mubr.bf16.gmra.mrb[0].mxu0 %v91
  %v224 = vpop.f32.mrb[0].mxu0
  %v225 = vadd.f32 %v52, %v224
  %v226 = vpop.f32.mrb[0].mxu0
  %v227 = vpop.f32.mrb[0].mxu0
  %v228 = vadd.f32 %v52, %v227
  %v229 = vpop.f32.mrb[0].mxu0
  %230 = vmatprep.mubr.bf16.mxu0 0
  %231 = vmatmul.mubr.bf16.gmra.mrb[0].mxu0 %v92
  %v232 = vpop.f32.mrb[0].mxu0
  %v233 = vadd.f32 %v52, %v232
  %v234 = vpop.f32.mrb[0].mxu0
  %v235 = vpop.f32.mrb[0].mxu0
  %v236 = vadd.f32 %v52, %v235
  %v237 = vpop.f32.mrb[0].mxu0
  %238 = vmatprep.mubr.bf16.mxu0 0
  %239 = vmatmul.mubr.bf16.gmra.mrb[0].mxu0 %v93
  %v240 = vpop.f32.mrb[0].mxu0
  %v241 = vadd.f32 %v52, %v240
  %v242 = vpop.f32.mrb[0].mxu0
  %v243 = vpop.f32.mrb[0].mxu0
  %v244 = vadd.f32 %v52, %v243
  %v245 = vpop.f32.mrb[0].mxu0
  %246 = vdwg.mxu0
  %v247 = vxor.u32 %v185, 2147483648
  %v248 = vxor.u32 %v188, 2147483648
  %v249 = vxor.u32 %v193, 2147483648
  %v250 = vxor.u32 %v196, 2147483648
  %v251 = vxor.u32 %v201, 2147483648
  %v252 = vxor.u32 %v204, 2147483648
  %v253 = vxor.u32 %v209, 2147483648
  %v254 = vxor.u32 %v212, 2147483648
  %v255 = vxor.u32 %v217, 2147483648
  %v256 = vxor.u32 %v220, 2147483648
  %v257 = vxor.u32 %v225, 2147483648
  %v258 = vxor.u32 %v228, 2147483648
  %v259 = vxor.u32 %v233, 2147483648
  %v260 = vxor.u32 %v236, 2147483648
  %v261 = vxor.u32 %v241, 2147483648
  %v262 = vxor.u32 %v244, 2147483648
  %v263 = vmul.f32 %v247, 1.442695
  %v264 = vpow.pop %v263
  %v265 = vmul.f32 %v248, 1.442695
  %v266 = vpow.pop %v265
  %v267 = vmul.f32 %v249, 1.442695
  %v268 = vpow.pop %v267
  %v269 = vmul.f32 %v250, 1.442695
  %v270 = vpow.pop %v269
  %v271 = vmul.f32 %v251, 1.442695
  %v272 = vpow.pop %v271
  %v273 = vmul.f32 %v252, 1.442695
  %v274 = vpow.pop %v273
  %v275 = vmul.f32 %v253, 1.442695
  %v276 = vpow.pop %v275
  %v277 = vmul.f32 %v254, 1.442695
  %v278 = vpow.pop %v277
  %v279 = vmul.f32 %v255, 1.442695
  %v280 = vpow.pop %v279
  %v281 = vmul.f32 %v256, 1.442695
  %v282 = vpow.pop %v281
  %v283 = vmul.f32 %v257, 1.442695
  %v284 = vpow.pop %v283
  %v285 = vmul.f32 %v258, 1.442695
  %v286 = vpow.pop %v285
  %v287 = vmul.f32 %v259, 1.442695
  %v288 = vpow.pop %v287
  %v289 = vmul.f32 %v260, 1.442695
  %v290 = vpow.pop %v289
  %v291 = vmul.f32 %v261, 1.442695
  %v292 = vpow.pop %v291
  %v293 = vmul.f32 %v262, 1.442695
  %v294 = vpow.pop %v293
  %v295 = vadd.f32 %v264, 1.0
  %v296 = vadd.f32 %v266, 1.0
  %v297 = vadd.f32 %v268, 1.0
  %v298 = vadd.f32 %v270, 1.0
  %v299 = vadd.f32 %v272, 1.0
  %v300 = vadd.f32 %v274, 1.0
  %v301 = vadd.f32 %v276, 1.0
  %v302 = vadd.f32 %v278, 1.0
  %v303 = vadd.f32 %v280, 1.0
  %v304 = vadd.f32 %v282, 1.0
  %v305 = vadd.f32 %v284, 1.0
  %v306 = vadd.f32 %v286, 1.0
  %v307 = vadd.f32 %v288, 1.0
  %v308 = vadd.f32 %v290, 1.0
  %v309 = vadd.f32 %v292, 1.0
  %v310 = vadd.f32 %v294, 1.0
  %v311 = vrcp.pop %v295
  %v312 = vmul.f32 1.0, %v311
  %v313 = vrcp.pop %v296
  %v314 = vmul.f32 1.0, %v313
  %v315 = vrcp.pop %v297
  %v316 = vmul.f32 1.0, %v315
  %v317 = vrcp.pop %v298
  %v318 = vmul.f32 1.0, %v317
  %v319 = vrcp.pop %v299
  %v320 = vmul.f32 1.0, %v319
  %v321 = vrcp.pop %v300
  %v322 = vmul.f32 1.0, %v321
  %v323 = vrcp.pop %v301
  %v324 = vmul.f32 1.0, %v323
  %v325 = vrcp.pop %v302
  %v326 = vmul.f32 1.0, %v325
  %v327 = vrcp.pop %v303
  %v328 = vmul.f32 1.0, %v327
  %v329 = vrcp.pop %v304
  %v330 = vmul.f32 1.0, %v329
  %v331 = vrcp.pop %v305
  %v332 = vmul.f32 1.0, %v331
  %v333 = vrcp.pop %v306
  %v334 = vmul.f32 1.0, %v333
  %v335 = vrcp.pop %v307
  %v336 = vmul.f32 1.0, %v335
  %v337 = vrcp.pop %v308
  %v338 = vmul.f32 1.0, %v337
  %v339 = vrcp.pop %v309
  %v340 = vmul.f32 1.0, %v339
  %v341 = vrcp.pop %v310
  %v342 = vmul.f32 1.0, %v341
  %343 = vst [vmem:[%s3] sm:$0xff] %v312
  %344 = vst [vmem:[%s3 + $0x8] sm:$0xff] %v314
  %345 = vst [vmem:[%s3 + $0x10] sm:$0xff] %v316
  %346 = vst [vmem:[%s3 + $0x18] sm:$0xff] %v318
  %347 = vst [vmem:[%s3 + $0x20] sm:$0xff] %v320
  %348 = vst [vmem:[%s3 + $0x28] sm:$0xff] %v322
  %349 = vst [vmem:[%s3 + $0x30] sm:$0xff] %v324
  %350 = vst [vmem:[%s3 + $0x38] sm:$0xff] %v326
  %351 = vst [vmem:[%s3 + $0x40] sm:$0xff] %v328
  %352 = vst [vmem:[%s3 + $0x48] sm:$0xff] %v330
  %353 = vst [vmem:[%s3 + $0x50] sm:$0xff] %v332
  %354 = vst [vmem:[%s3 + $0x58] sm:$0xff] %v334
  %355 = vst [vmem:[%s3 + $0x60] sm:$0xff] %v336
  %356 = vst [vmem:[%s3 + $0x68] sm:$0xff] %v338
  %357 = vst [vmem:[%s3 + $0x70] sm:$0xff] %v340
  %358 = vst [vmem:[%s3 + $0x78] sm:$0xff] %v342
  // Predicated region
  $region14: #{vae_forward.20} parent=0 // pred_check
    _
  $region15: #{vae_forward.20} parent=0 // pred_check_branch
    %360 = sbr.rel (0) target = $region17
  $region16: #{vae_forward.20} parent=0 // pred_region
    _
  $region17: #{vae_forward.20} parent=0 // pred_fallthru
    _
  // Predicated region
  $region18: #{vae_forward.20} parent=0 // pred_check
    _
  $region19: #{vae_forward.20} parent=0 // pred_check_branch
    %362 = sbr.rel (0) target = $region21
  $region20: #{vae_forward.20} parent=0 // pred_region
    _
  $region21: #{vae_forward.20} parent=0 // pred_fallthru
    _

</llo_original>
